<compile_context>
chip_gen: v6e
topology: v6e:2x2x1
jax: 0.10.0
libtpu: 0.0.40
codegen_flags: <defaults>
</compile_context>

<pallas_src>
import functools

import numpy as np

import jax
import jax.numpy as jnp
from jax.experimental import pallas as pl
from jax.experimental.pallas import tpu as pltpu


# ----------------------------------------------------------------------------
# Static index map: conv1 im2col columns gathered from the zero-padded board.
#   lane = m*4 + (u*2+v),  m = (a*2+b)*4 + (ki*2+kj)
#   (a,b)   : conv2 output position      (0..1)^2
#   (ki,kj) : conv2 tap -> conv1 position (r,c) = (2a+ki, 2b+kj)
#   (u,v)   : conv1 tap -> padded input coords (2r+u, 2c+v) on a 10x10 board
# ----------------------------------------------------------------------------
def _build_col_index():
    idx = []
    for a in range(2):
        for b in range(2):
            for ki in range(2):
                for kj in range(2):
                    r, c = 2 * a + ki, 2 * b + kj
                    for u in range(2):
                        for v in range(2):
                            idx.append((2 * r + u) * 10 + (2 * c + v))
    return np.asarray(idx, dtype=np.int32)


_COL_IDX = _build_col_index()          # (64,)

# Static lane offsets of the packed bias vector (all multiples of 128).
_B1 = (0, 512)       # conv1 bias tiled x16
_B2 = (512, 768)     # conv2 bias tiled x4
_B3 = (768, 896)     # conv3 bias
_BF1 = (896, 1408)   # fc1 bias
_BF2 = (1408, 1536)  # fc2 bias (zero-padded 4 -> 128)


def _round_up(x, m):
    return ((x + m - 1) // m) * m


def _block_diag(w, n):
    """Block-diagonal matrix with `n` copies of `w` on the diagonal."""
    k, m = w.shape
    out = jnp.zeros((n * k, n * m), w.dtype)
    for i in range(n):
        out = out.at[i * k:(i + 1) * k, i * m:(i + 1) * m].set(w)
    return out


# ----------------------------------------------------------------------------
# Parameters (deterministic synthetic init; matmul-friendly layouts)
#   conv weights stored flattened (K*K*Cin, Cout), row = (u*K+v)*Cin + cin
#   fc  weights stored (in, out)
# ----------------------------------------------------------------------------
def init_params(key, input_size=1, output_size=4):
    ks = jax.random.split(key, 10)
    s = 0.05

    def w(k, shape):
        return jax.random.normal(k, shape, jnp.float32) * s

    return {
        "w1": w(ks[0], (2 * 2 * input_size, 32)),  "b1": w(ks[1], (32,)),
        "w2": w(ks[2], (2 * 2 * 32, 64)),          "b2": w(ks[3], (64,)),
        "w3": w(ks[4], (2 * 2 * 64, 128)),         "b3": w(ks[5], (128,)),
        "wf1": w(ks[6], (128, 512)),               "bf1": w(ks[7], (512,)),
        "wf2": w(ks[8], (512, output_size)),       "bf2": w(ks[9], (output_size,)),
    }


def stage_fused_params(params, compute_dtype=jnp.bfloat16):
    """Build the fused, MXU-friendly weight layouts (done once, outside jit)."""
    c = compute_dtype
    out_size = params["wf2"].shape[1]

    # conv1 @ 16 positions as a block-diagonal GEMM; zero-pad K: 64 -> 128
    # lanes so the streamed input tile is lane-dense (zero rows contribute 0).
    w1bd = jnp.pad(_block_diag(params["w1"], 16), ((0, 64), (0, 0)))   # (128, 512)
    # conv2 @ 4 positions as a block-diagonal GEMM.
    w2bd = _block_diag(params["w2"], 4)                                 # (512, 256)
    # fc2: zero-pad N: out_size -> 128 so the output block is lane-dense.
    wf2p = jnp.pad(params["wf2"], ((0, 0), (0, 128 - out_size)))        # (512, 128)

    bias = jnp.concatenate([
        jnp.tile(params["b1"], 16),                          # 512
        jnp.tile(params["b2"], 4),                           # 256
        params["b3"],                                        # 128
        params["bf1"],                                       # 512
        jnp.pad(params["bf2"], (0, 128 - out_size)),         # 128
    ]).reshape(1, 1536).astype(jnp.float32)

    return {
        "w1": w1bd.astype(c),
        "w2": w2bd.astype(c),
        "w3": params["w3"].astype(c),
        "wf1": params["wf1"].astype(c),
        "wf2": wf2p.astype(c),
        "bias": bias,
    }


# ----------------------------------------------------------------------------
# Fused Pallas kernel: whole forward for one batch tile.
# ----------------------------------------------------------------------------
def _fused_net_kernel(cols_ref, w1_ref, w2_ref, w3_ref, wf1_ref, wf2_ref,
                      b_ref, out_ref):
    cdt = w1_ref.dtype                      # compute dtype (bf16)
    f32 = jnp.float32

    def dense(x, w_ref, b_lo, b_hi, relu):
        # bf16 operands -> MXU, f32 accumulation; f32 bias/ReLU epilogue,
        # pack back to bf16 at the layer boundary (halves VMEM/spill bytes).
        y = jnp.dot(x, w_ref[...], preferred_element_type=f32)
        y = y + b_ref[:, b_lo:b_hi]
        if relu:
            return jnp.maximum(y, 0.0).astype(cdt)
        return y

    h = dense(cols_ref[...], w1_ref, *_B1, True)    # conv1 @ 16 pos -> (TB, 512)
    h = dense(h, w2_ref, *_B2, True)                # conv2 @ 4 pos  -> (TB, 256)
    h = dense(h, w3_ref, *_B3, True)                # conv3          -> (TB, 128)
    h = dense(h, wf1_ref, *_BF1, True)              # fc1            -> (TB, 512)
    out = dense(h, wf2_ref, *_BF2, False)           # fc2 (padded)   -> (TB, 128)
    out_ref[...] = out.astype(out_ref.dtype)


def _conv1_cols(state, dtype):
    """(B, 64) board -> (B, 128) lane-dense conv1 im2col columns (bf16)."""
    B = state.shape[0]
    x = state.reshape(B, 8, 8).astype(jnp.float32)
    xp = jnp.pad(x, ((0, 0), (1, 1), (1, 1))).reshape(B, 100)    # padding=1
    cols = jnp.take(xp, jnp.asarray(_COL_IDX), axis=1)           # (B, 64)
    cols = jnp.pad(cols, ((0, 0), (0, 64)))                      # pad to 128 lanes
    return cols.astype(dtype)


def fused_forward(fused, state, *, block_b=512, output_size=4):
    """Forward pass of `Net` using one fused Pallas kernel."""
    assert block_b % 8 == 0
    B = state.shape[0]
    cdt = fused["w1"].dtype
    cols = _conv1_cols(state, cdt)                               # (B, 128) bf16

    # Big tiles amortize the ~0.35us/step grid overhead; cap TB so that a
    # large batch still yields >= 2 grid steps (both v7x TensorCores busy).
    TB = min(block_b, max(8, _round_up(-(-B // 2), 8)))
    Bp = _round_up(B, TB)
    if Bp != B:
        cols = jnp.pad(cols, ((0, Bp - B), (0, 0)))

    order = ["w1", "w2", "w3", "wf1", "wf2", "bias"]
    tensors = [fused[k] for k in order]

    flops = 2 * Bp * (128 * 512 + 512 * 256 + 256 * 128 + 128 * 512 + 512 * 128)
    bytes_accessed = int(
        cols.size * cols.dtype.itemsize
        + sum(t.size * t.dtype.itemsize for t in tensors)
        + Bp * 128 * 4)

    out = pl.pallas_call(
        _fused_net_kernel,
        out_shape=jax.ShapeDtypeStruct((Bp, 128), jnp.float32),
        grid=(Bp // TB,),
        in_specs=[pl.BlockSpec((TB, 128), lambda i: (i, 0))]
        + [pl.BlockSpec(t.shape, lambda i: (0, 0)) for t in tensors],
        out_specs=pl.BlockSpec((TB, 128), lambda i: (i, 0)),
        compiler_params=pltpu.CompilerParams(
            dimension_semantics=("parallel",)),
        cost_estimate=pl.CostEstimate(
            flops=flops, transcendentals=0, bytes_accessed=bytes_accessed),
    )(cols, *tensors)
    return out[:B, :output_size]


# ----------------------------------------------------------------------------
# Pure-JAX f32 reference (PyTorch semantics), for correctness check.
# ----------------------------------------------------------------------------
def ref_forward(params, state):
    B = state.shape[0]
    x = state.reshape(B, 1, 8, 8).astype(jnp.float32)
    hi = jax.lax.Precision.HIGHEST

    def conv(x, wflat, b, k, stride, pad):
        cin, cout = x.shape[1], wflat.shape[1]
        w = wflat.reshape(k, k, cin, cout).transpose(3, 2, 0, 1)   # OIHW
        y = jax.lax.conv_general_dilated(
            x, w, (stride, stride), [(pad, pad), (pad, pad)],
            dimension_numbers=("NCHW", "OIHW", "NCHW"), precision=hi)
        return jax.nn.relu(y + b.reshape(1, -1, 1, 1))

    x = conv(x, params["w1"], params["b1"], 2, 2, 1)    # (B, 32, 5, 5)
    x = conv(x, params["w2"], params["b2"], 2, 2, 0)    # (B, 64, 2, 2)
    x = conv(x, params["w3"], params["b3"], 2, 1, 0)    # (B, 128, 1, 1)
    x = x.reshape(B, 128)
    x = jax.nn.relu(jnp.dot(x, params["wf1"], precision=hi) + params["bf1"])
    return jnp.dot(x, params["wf2"], precision=hi) + params["bf2"]


if __name__ == "__main__":
    key = jax.random.PRNGKey(0)
    pkey, xkey = jax.random.split(key)
    params = init_params(pkey, input_size=1, output_size=4)
    fused = stage_fused_params(params, compute_dtype=jnp.bfloat16)

    # --- Test 1: tiny batch (single grid step) -------------------------------
    B = 2
    state = jax.random.normal(xkey, (B, 64), jnp.float32)   # flat 8x8 boards
    fwd = jax.jit(functools.partial(fused_forward, block_b=512))
    actions = jax.block_until_ready(fwd(fused, state))
    expected = ref_forward(params, state)
    assert actions.shape == (B, 4), actions.shape
    # bf16 operands / f32 accumulation vs f32 reference -> loosened tolerance.
    assert jnp.allclose(actions, expected, atol=5e-3, rtol=5e-2), (
        float(jnp.max(jnp.abs(actions - expected))))

    # --- Test 2: multi-grid-step + non-multiple-of-8 batch (padding path) ----
    B2 = 203
    state2 = jax.random.normal(jax.random.PRNGKey(1), (B2, 64), jnp.float32)
    fwd2 = jax.jit(functools.partial(fused_forward, block_b=64))
    actions2 = jax.block_until_ready(fwd2(fused, state2))
    expected2 = ref_forward(params, state2)
    assert actions2.shape == (B2, 4), actions2.shape
    assert jnp.allclose(actions2, expected2, atol=5e-3, rtol=5e-2), (
        float(jnp.max(jnp.abs(actions2 - expected2))))

    print("KERNEL_OK")
</pallas_src>

<mosaic_0001>
module attributes {stable_mosaic.version = 11 : i64} {
  func.func @_fused_net_kernel(%arg0: i32, %arg1: memref<8x128xbf16, #tpu.memory_space<vmem>>, %arg2: memref<128x512xbf16, #tpu.memory_space<vmem>>, %arg3: memref<512x256xbf16, #tpu.memory_space<vmem>>, %arg4: memref<256x128xbf16, #tpu.memory_space<vmem>>, %arg5: memref<128x512xbf16, #tpu.memory_space<vmem>>, %arg6: memref<512x128xbf16, #tpu.memory_space<vmem>>, %arg7: memref<1x1536xf32, #tpu.memory_space<vmem>>, %arg8: memref<8x128xf32, #tpu.memory_space<vmem>>) attributes {dimension_semantics = [#tpu.dimension_semantics<parallel>], iteration_bounds = array<i64: 1>, scalar_prefetch = 0 : i64, scratch_operands = 0 : i64, tpu.core_type = #tpu.core_type<tc>, window_params = [{transform_indices = @transform_0, window_bounds = array<i64: 8, 128>}, {pipeline_mode = #tpu.pipeline_mode<synchronous>, transform_indices = @transform_1, window_bounds = array<i64: 128, 512>}, {pipeline_mode = #tpu.pipeline_mode<synchronous>, transform_indices = @transform_2, window_bounds = array<i64: 512, 256>}, {pipeline_mode = #tpu.pipeline_mode<synchronous>, transform_indices = @transform_3, window_bounds = array<i64: 256, 128>}, {pipeline_mode = #tpu.pipeline_mode<synchronous>, transform_indices = @transform_4, window_bounds = array<i64: 128, 512>}, {pipeline_mode = #tpu.pipeline_mode<synchronous>, transform_indices = @transform_5, window_bounds = array<i64: 512, 128>}, {pipeline_mode = #tpu.pipeline_mode<synchronous>, transform_indices = @transform_6, window_bounds = array<i64: 1, 1536>}, {transform_indices = @transform_7, window_bounds = array<i64: 8, 128>}]} {
    %c0 = arith.constant 0 : index
    %c0_0 = arith.constant 0 : index
    %0 = vector.load %arg1[%c0, %c0_0] : memref<8x128xbf16, #tpu.memory_space<vmem>>, vector<8x128xbf16>
    %c0_1 = arith.constant 0 : index
    %c0_2 = arith.constant 0 : index
    %1 = vector.load %arg2[%c0_1, %c0_2] : memref<128x512xbf16, #tpu.memory_space<vmem>>, vector<128x512xbf16>
    %cst = arith.constant dense<0.000000e+00> : vector<8x512xf32>
    %2 = tpu.matmul %0, %1, %cst {dimension_numbers = #tpu.dot_dimension_numbers<[1], [0], [0], [1], [0, 0, 1, 1], [], []>} : vector<8x128xbf16>, vector<128x512xbf16>, vector<8x512xf32> -> vector<8x512xf32>
    %c0_3 = arith.constant 0 : index
    %c0_4 = arith.constant 0 : index
    %3 = vector.load %arg7[%c0_3, %c0_4] : memref<1x1536xf32, #tpu.memory_space<vmem>>, vector<1x512xf32>
    %4 = vector.broadcast %3 : vector<1x512xf32> to vector<8x512xf32>
    %5 = arith.addf %2, %4 : vector<8x512xf32>
    %cst_5 = arith.constant 0.000000e+00 : f32
    %6 = vector.broadcast %cst_5 : f32 to vector<8x512xf32>
    %7 = arith.maximumf %5, %6 : vector<8x512xf32>
    %8 = arith.truncf %7 : vector<8x512xf32> to vector<8x512xbf16>
    %c0_6 = arith.constant 0 : index
    %c0_7 = arith.constant 0 : index
    %9 = vector.load %arg3[%c0_6, %c0_7] : memref<512x256xbf16, #tpu.memory_space<vmem>>, vector<512x256xbf16>
    %cst_8 = arith.constant dense<0.000000e+00> : vector<8x256xf32>
    %10 = tpu.matmul %8, %9, %cst_8 {dimension_numbers = #tpu.dot_dimension_numbers<[1], [0], [0], [1], [0, 0, 1, 1], [], []>} : vector<8x512xbf16>, vector<512x256xbf16>, vector<8x256xf32> -> vector<8x256xf32>
    %c0_9 = arith.constant 0 : index
    %c512 = arith.constant 512 : index
    %11 = vector.load %arg7[%c0_9, %c512] : memref<1x1536xf32, #tpu.memory_space<vmem>>, vector<1x256xf32>
    %12 = vector.broadcast %11 : vector<1x256xf32> to vector<8x256xf32>
    %13 = arith.addf %10, %12 : vector<8x256xf32>
    %cst_10 = arith.constant 0.000000e+00 : f32
    %14 = vector.broadcast %cst_10 : f32 to vector<8x256xf32>
    %15 = arith.maximumf %13, %14 : vector<8x256xf32>
    %16 = arith.truncf %15 : vector<8x256xf32> to vector<8x256xbf16>
    %c0_11 = arith.constant 0 : index
    %c0_12 = arith.constant 0 : index
    %17 = vector.load %arg4[%c0_11, %c0_12] : memref<256x128xbf16, #tpu.memory_space<vmem>>, vector<256x128xbf16>
    %cst_13 = arith.constant dense<0.000000e+00> : vector<8x128xf32>
    %18 = tpu.matmul %16, %17, %cst_13 {dimension_numbers = #tpu.dot_dimension_numbers<[1], [0], [0], [1], [0, 0, 1, 1], [], []>} : vector<8x256xbf16>, vector<256x128xbf16>, vector<8x128xf32> -> vector<8x128xf32>
    %c0_14 = arith.constant 0 : index
    %c768 = arith.constant 768 : index
    %19 = vector.load %arg7[%c0_14, %c768] : memref<1x1536xf32, #tpu.memory_space<vmem>>, vector<1x128xf32>
    %20 = vector.broadcast %19 : vector<1x128xf32> to vector<8x128xf32>
    %21 = arith.addf %18, %20 : vector<8x128xf32>
    %cst_15 = arith.constant 0.000000e+00 : f32
    %22 = vector.broadcast %cst_15 : f32 to vector<8x128xf32>
    %23 = arith.maximumf %21, %22 : vector<8x128xf32>
    %24 = arith.truncf %23 : vector<8x128xf32> to vector<8x128xbf16>
    %c0_16 = arith.constant 0 : index
    %c0_17 = arith.constant 0 : index
    %25 = vector.load %arg5[%c0_16, %c0_17] : memref<128x512xbf16, #tpu.memory_space<vmem>>, vector<128x512xbf16>
    %cst_18 = arith.constant dense<0.000000e+00> : vector<8x512xf32>
    %26 = tpu.matmul %24, %25, %cst_18 {dimension_numbers = #tpu.dot_dimension_numbers<[1], [0], [0], [1], [0, 0, 1, 1], [], []>} : vector<8x128xbf16>, vector<128x512xbf16>, vector<8x512xf32> -> vector<8x512xf32>
    %c0_19 = arith.constant 0 : index
    %c896 = arith.constant 896 : index
    %27 = vector.load %arg7[%c0_19, %c896] : memref<1x1536xf32, #tpu.memory_space<vmem>>, vector<1x512xf32>
    %28 = vector.broadcast %27 : vector<1x512xf32> to vector<8x512xf32>
    %29 = arith.addf %26, %28 : vector<8x512xf32>
    %cst_20 = arith.constant 0.000000e+00 : f32
    %30 = vector.broadcast %cst_20 : f32 to vector<8x512xf32>
    %31 = arith.maximumf %29, %30 : vector<8x512xf32>
    %32 = arith.truncf %31 : vector<8x512xf32> to vector<8x512xbf16>
    %c0_21 = arith.constant 0 : index
    %c0_22 = arith.constant 0 : index
    %33 = vector.load %arg6[%c0_21, %c0_22] : memref<512x128xbf16, #tpu.memory_space<vmem>>, vector<512x128xbf16>
    %cst_23 = arith.constant dense<0.000000e+00> : vector<8x128xf32>
    %34 = tpu.matmul %32, %33, %cst_23 {dimension_numbers = #tpu.dot_dimension_numbers<[1], [0], [0], [1], [0, 0, 1, 1], [], []>} : vector<8x512xbf16>, vector<512x128xbf16>, vector<8x128xf32> -> vector<8x128xf32>
    %c0_24 = arith.constant 0 : index
    %c1408 = arith.constant 1408 : index
    %35 = vector.load %arg7[%c0_24, %c1408] : memref<1x1536xf32, #tpu.memory_space<vmem>>, vector<1x128xf32>
    %36 = vector.broadcast %35 : vector<1x128xf32> to vector<8x128xf32>
    %37 = arith.addf %34, %36 : vector<8x128xf32>
    %c0_25 = arith.constant 0 : index
    %c0_26 = arith.constant 0 : index
    %38 = vector.load %arg8[%c0_25, %c0_26] : memref<8x128xf32, #tpu.memory_space<vmem>>, vector<8x128xf32>
    tpu.vector_store %arg8[%c0_25, %c0_26], %37 {strides = array<i32>} : memref<8x128xf32, #tpu.memory_space<vmem>>, vector<8x128xf32>,
    return
  }
  func.func @transform_0(%arg0: i32) -> (i32, i32) {
    %c0_i32 = arith.constant 0 : i32
    %c0_i32_0 = arith.constant 0 : i32
    return %arg0, %c0_i32 : i32, i32
  }
  func.func @transform_1(%arg0: i32) -> (i32, i32) {
    %c0_i32 = arith.constant 0 : i32
    %c0_i32_0 = arith.constant 0 : i32
    %c0_i32_1 = arith.constant 0 : i32
    return %c0_i32, %c0_i32_0 : i32, i32
  }
  func.func @transform_2(%arg0: i32) -> (i32, i32) {
    %c0_i32 = arith.constant 0 : i32
    %c0_i32_0 = arith.constant 0 : i32
    %c0_i32_1 = arith.constant 0 : i32
    return %c0_i32, %c0_i32_0 : i32, i32
  }
  func.func @transform_3(%arg0: i32) -> (i32, i32) {
    %c0_i32 = arith.constant 0 : i32
    %c0_i32_0 = arith.constant 0 : i32
    %c0_i32_1 = arith.constant 0 : i32
    return %c0_i32, %c0_i32_0 : i32, i32
  }
  func.func @transform_4(%arg0: i32) -> (i32, i32) {
    %c0_i32 = arith.constant 0 : i32
    %c0_i32_0 = arith.constant 0 : i32
    %c0_i32_1 = arith.constant 0 : i32
    return %c0_i32, %c0_i32_0 : i32, i32
  }
  func.func @transform_5(%arg0: i32) -> (i32, i32) {
    %c0_i32 = arith.constant 0 : i32
    %c0_i32_0 = arith.constant 0 : i32
    %c0_i32_1 = arith.constant 0 : i32
    return %c0_i32, %c0_i32_0 : i32, i32
  }
  func.func @transform_6(%arg0: i32) -> (i32, i32) {
    %c0_i32 = arith.constant 0 : i32
    %c0_i32_0 = arith.constant 0 : i32
    %c0_i32_1 = arith.constant 0 : i32
    return %c0_i32, %c0_i32_0 : i32, i32
  }
  func.func @transform_7(%arg0: i32) -> (i32, i32) {
    %c0_i32 = arith.constant 0 : i32
    %c0_i32_0 = arith.constant 0 : i32
    return %arg0, %c0_i32 : i32, i32
  }
}

</mosaic_0001>

<llo_original>
// kernel: fused_forward.1
$region0: #{fused_forward.1}
  #allocation0 [shape = 'u32[]', space=smem, size = 0x4, offset = 0x4, fixed_abs, tag = 'smem constant byte address 0x4 - core index']
  #allocation1 [shape = 'u32[144,128]{1,0:T(1,128)}', space=vmem, size = 0x12000, scoped, tag = 'internal scratch']
  %s0 = inlined_call_operand.vmem [shape: bf16[8,128], index: 0, kind: input, shape index: {}]
  %s1 = inlined_call_operand.hbm [shape: bf16[128,512], index: 1, kind: input, shape index: {}]
  %s2 = inlined_call_operand.hbm [shape: bf16[512,256], index: 2, kind: input, shape index: {}]
  %s3 = inlined_call_operand.vmem [shape: bf16[256,128], index: 3, kind: input, shape index: {}]
  %s4 = inlined_call_operand.hbm [shape: bf16[128,512], index: 4, kind: input, shape index: {}]
  %s5 = inlined_call_operand.hbm [shape: bf16[512,128], index: 5, kind: input, shape index: {}]
  %s6 = inlined_call_operand.vmem [shape: f32[1,1536], index: 6, kind: input, shape index: {}]
  %s7 = inlined_call_operand.vmem [shape: f32[8,128], index: 7, kind: output, shape index: {}]
  %s8 = sld [smem:[#allocation0]]
  $region54: #{fused_forward.1} parent=0
    _
  %s10 = ssub.s32 1, %s8
  %s11 = scalar_select 0, %s10, %s8
  $region1: #{fused_forward.1} parent=0
    #allocation2 [shape = 'u8[131072]{0}', space=vmem, size = 0x20000, scoped, tag = 'input window, operand 1, single buffered']
    #allocation3 [shape = 's32[1]{0}', space=sflag, size = 0x4, scoped, tag = 'scoped memory for fused_forward.1']
    #allocation4 [shape = 'u8[262144]{0}', space=vmem, size = 0x40000, scoped, tag = 'input window, operand 2, single buffered']
    #allocation5 [shape = 's32[1]{0}', space=sflag, size = 0x4, scoped, tag = 'scoped memory for fused_forward.1']
    #allocation6 [shape = 'u8[131072]{0}', space=vmem, size = 0x20000, scoped, tag = 'input window, operand 4, single buffered']
    #allocation7 [shape = 'u8[131072]{0}', space=vmem, size = 0x20000, scoped, tag = 'input window, operand 5, single buffered']
    #allocation8 [shape = 's32[1]{0}', space=sflag, size = 0x4, scoped, tag = 'scoped memory for fused_forward.1']
    %12 = vsyncpa [#allocation3], 0
    %13 = vsyncpa [#allocation5], 0
    %14 = vsyncpa [#allocation8], 0
    // Predicated region
    $region2: #{fused_forward.1} parent=1 // pred_check
      _
    $region3: #{fused_forward.1} parent=1 // pred_check_branch
      %16 = sbr.rel (0) target = $region5
    $region4: #{fused_forward.1} parent=1 // pred_region
      _
    $region5: #{fused_forward.1} parent=1 // pred_fallthru
      _
    // Predicated region
    $region6: #{fused_forward.1} parent=1 // pred_check
      _
    $region7: #{fused_forward.1} parent=1 // pred_check_branch
      %18 = sbr.rel (0) target = $region9
    $region8: #{fused_forward.1} parent=1 // pred_region
      %s20 = ssub.s32 4096, 4096
      %21 = vsyncadd [#allocation3], %s20
      %s22 = sshll.u32 [#allocation2], 4
      %s23 = int_to_ptr.vmem [resolvable:$true] %s22
      %28 = dma.hbm_to_vmem [thread:$0]  %s1, 4096, %s23, [#allocation3], 256, 256, 16
    $region9: #{fused_forward.1} parent=1 // pred_fallthru
      _
    // Predicated region
    $region10: #{fused_forward.1} parent=1 // pred_check
      _
    $region11: #{fused_forward.1} parent=1 // pred_check_branch
      %30 = sbr.rel (0) target = $region13
    $region12: #{fused_forward.1} parent=1 // pred_region
      %s32 = ssub.s32 8192, 8192
      %33 = vsyncadd [#allocation5], %s32
      %s34 = sshll.u32 [#allocation4], 4
      %s35 = int_to_ptr.vmem [resolvable:$true] %s34
      %40 = dma.hbm_to_vmem [thread:$0]  %s2, 8192, %s35, [#allocation5], 128, 128, 8
    $region13: #{fused_forward.1} parent=1 // pred_fallthru
      _
    // Predicated region
    $region14: #{fused_forward.1} parent=1 // pred_check
      _
    $region15: #{fused_forward.1} parent=1 // pred_check_branch
      %42 = sbr.rel (0) target = $region17
    $region16: #{fused_forward.1} parent=1 // pred_region
      _
    $region17: #{fused_forward.1} parent=1 // pred_fallthru
      _
    // Predicated region
    $region18: #{fused_forward.1} parent=1 // pred_check
      _
    $region19: #{fused_forward.1} parent=1 // pred_check_branch
      %44 = sbr.rel (0) target = $region21
    $region20: #{fused_forward.1} parent=1 // pred_region
      %s46 = ssub.s32 4096, 4096
      %47 = vsyncadd [#allocation5], %s46
      %s48 = sshll.u32 [#allocation6], 4
      %s49 = int_to_ptr.vmem [resolvable:$true] %s48
      %54 = dma.hbm_to_vmem [thread:$0]  %s4, 4096, %s49, [#allocation5], 256, 256, 16
    $region21: #{fused_forward.1} parent=1 // pred_fallthru
      _
    // Predicated region
    $region22: #{fused_forward.1} parent=1 // pred_check
      _
    $region23: #{fused_forward.1} parent=1 // pred_check_branch
      %56 = sbr.rel (0) target = $region25
    $region24: #{fused_forward.1} parent=1 // pred_region
      %s58 = ssub.s32 4096, 4096
      %59 = vsyncadd [#allocation8], %s58
      %s60 = sshll.u32 [#allocation7], 4
      %s61 = int_to_ptr.vmem [resolvable:$true] %s60
      %66 = dma.hbm_to_vmem [thread:$0]  %s5, 4096, %s61, [#allocation8], 64, 64, 4
    $region25: #{fused_forward.1} parent=1 // pred_fallthru
      _
    // Predicated region
    $region26: #{fused_forward.1} parent=1 // pred_check
      _
    $region27: #{fused_forward.1} parent=1 // pred_check_branch
      %68 = sbr.rel (0) target = $region29
    $region28: #{fused_forward.1} parent=1 // pred_region
      _
    $region29: #{fused_forward.1} parent=1 // pred_fallthru
      _
    // Predicated region
    $region30: #{fused_forward.1} parent=1 // pred_check
      _
    $region31: #{fused_forward.1} parent=1 // pred_check_branch
      %70 = sbr.rel (0) target = $region33
    $region32: #{fused_forward.1} parent=1 // pred_region
      %71 = dma.done [#allocation3], 4096
    $region33: #{fused_forward.1} parent=1 // pred_fallthru
      _
    // Predicated region
    $region34: #{fused_forward.1} parent=1 // pred_check
      _
    $region35: #{fused_forward.1} parent=1 // pred_check_branch
      %73 = sbr.rel (0) target = $region37
    $region36: #{fused_forward.1} parent=1 // pred_region
      %74 = dma.done [#allocation5], 8192
    $region37: #{fused_forward.1} parent=1 // pred_fallthru
      _
    // Predicated region
    $region38: #{fused_forward.1} parent=1 // pred_check
      _
    $region39: #{fused_forward.1} parent=1 // pred_check_branch
      %76 = sbr.rel (0) target = $region41
    $region40: #{fused_forward.1} parent=1 // pred_region
      %77 = dma.done [#allocation5], 4096
    $region41: #{fused_forward.1} parent=1 // pred_fallthru
      _
    // Predicated region
    $region42: #{fused_forward.1} parent=1 // pred_check
      _
    $region43: #{fused_forward.1} parent=1 // pred_check_branch
      %79 = sbr.rel (0) target = $region45
    $region44: #{fused_forward.1} parent=1 // pred_region
      %80 = dma.done [#allocation8], 4096
    $region45: #{fused_forward.1} parent=1 // pred_fallthru
      _
    %v82 = vld [vmem:[%s0] sm:$0xf]
    %v83 = vld [vmem:[#allocation2] sm:$0xff]
    %v84 = vld [vmem:[#allocation2 + $0x8] sm:$0xff]
    %v85 = vld [vmem:[#allocation2 + $0x10] sm:$0xff]
    %v86 = vld [vmem:[#allocation2 + $0x18] sm:$0xff]
    %v87 = vld [vmem:[#allocation2 + $0x20] sm:$0xff]
    %v88 = vld [vmem:[#allocation2 + $0x28] sm:$0xff]
    %v89 = vld [vmem:[#allocation2 + $0x30] sm:$0xff]
    %v90 = vld [vmem:[#allocation2 + $0x38] sm:$0xff]
    %v91 = vld [vmem:[#allocation2 + $0x40] sm:$0xff]
    %v92 = vld [vmem:[#allocation2 + $0x48] sm:$0xff]
    %v93 = vld [vmem:[#allocation2 + $0x50] sm:$0xff]
    %v94 = vld [vmem:[#allocation2 + $0x58] sm:$0xff]
    %v95 = vld [vmem:[#allocation2 + $0x60] sm:$0xff]
    %v96 = vld [vmem:[#allocation2 + $0x68] sm:$0xff]
    %v97 = vld [vmem:[#allocation2 + $0x70] sm:$0xff]
    %v98 = vld [vmem:[#allocation2 + $0x78] sm:$0xff]
    %v99 = vld [vmem:[#allocation2 + $0x80] sm:$0xff]
    %v100 = vld [vmem:[#allocation2 + $0x88] sm:$0xff]
    %v101 = vld [vmem:[#allocation2 + $0x90] sm:$0xff]
    %v102 = vld [vmem:[#allocation2 + $0x98] sm:$0xff]
    %v103 = vld [vmem:[#allocation2 + $0xa0] sm:$0xff]
    %v104 = vld [vmem:[#allocation2 + $0xa8] sm:$0xff]
    %v105 = vld [vmem:[#allocation2 + $0xb0] sm:$0xff]
    %v106 = vld [vmem:[#allocation2 + $0xb8] sm:$0xff]
    %v107 = vld [vmem:[#allocation2 + $0xc0] sm:$0xff]
    %v108 = vld [vmem:[#allocation2 + $0xc8] sm:$0xff]
    %v109 = vld [vmem:[#allocation2 + $0xd0] sm:$0xff]
    %v110 = vld [vmem:[#allocation2 + $0xd8] sm:$0xff]
    %v111 = vld [vmem:[#allocation2 + $0xe0] sm:$0xff]
    %v112 = vld [vmem:[#allocation2 + $0xe8] sm:$0xff]
    %v113 = vld [vmem:[#allocation2 + $0xf0] sm:$0xff]
    %v114 = vld [vmem:[#allocation2 + $0xf8] sm:$0xff]
    %v115 = vld [vmem:[%s6] sm:$0xf]
    %v117 = vlaneseq
    %v118 = vshrl.u32 %v117, 7
    %v119 = vsub.s32 0, %v118
    %v120 = vrot.slane %v115, %v119
    %v121 = vlaneseq
    %v122 = vshrl.u32 %v121, 7
    %v123 = vsub.s32 1, %v122
    %v124 = vrot.slane %v115, %v123
    %v125 = vlaneseq
    %v126 = vshrl.u32 %v125, 7
    %v127 = vsub.s32 2, %v126
    %v128 = vrot.slane %v115, %v127
    %v129 = vlaneseq
    %v130 = vshrl.u32 %v129, 7
    %v131 = vsub.s32 3, %v130
    %v132 = vrot.slane %v115, %v131
    %v169 = vunpack.c.l.b16 %v83
    %v170 = vunpack.c.h.b16 %v83
    %v171 = vunpack.c.l.b16 %v84
    %v172 = vunpack.c.h.b16 %v84
    %v173 = vunpack.c.l.b16 %v85
    %v174 = vunpack.c.h.b16 %v85
    %v175 = vunpack.c.l.b16 %v86
    %v176 = vunpack.c.h.b16 %v86
    %v177 = vunpack.c.l.b16 %v87
    %v178 = vunpack.c.h.b16 %v87
    %v179 = vunpack.c.l.b16 %v88
    %v180 = vunpack.c.h.b16 %v88
    %v181 = vunpack.c.l.b16 %v89
    %v182 = vunpack.c.h.b16 %v89
    %v183 = vunpack.c.l.b16 %v90
    %v184 = vunpack.c.h.b16 %v90
    %v185 = vunpack.c.l.b16 %v91
    %v186 = vunpack.c.h.b16 %v91
    %v187 = vunpack.c.l.b16 %v92
    %v188 = vunpack.c.h.b16 %v92
    %v189 = vunpack.c.l.b16 %v93
    %v190 = vunpack.c.h.b16 %v93
    %v191 = vunpack.c.l.b16 %v94
    %v192 = vunpack.c.h.b16 %v94
    %v193 = vunpack.c.l.b16 %v95
    %v194 = vunpack.c.h.b16 %v95
    %v195 = vunpack.c.l.b16 %v96
    %v196 = vunpack.c.h.b16 %v96
    %v197 = vunpack.c.l.b16 %v97
    %v198 = vunpack.c.h.b16 %v97
    %v199 = vunpack.c.l.b16 %v98
    %v200 = vunpack.c.h.b16 %v98
    %v201 = vunpack.c.l.b16 %v99
    %v202 = vunpack.c.h.b16 %v99
    %v203 = vunpack.c.l.b16 %v100
    %v204 = vunpack.c.h.b16 %v100
    %v205 = vunpack.c.l.b16 %v101
    %v206 = vunpack.c.h.b16 %v101
    %v207 = vunpack.c.l.b16 %v102
    %v208 = vunpack.c.h.b16 %v102
    %v209 = vunpack.c.l.b16 %v103
    %v210 = vunpack.c.h.b16 %v103
    %v211 = vunpack.c.l.b16 %v104
    %v212 = vunpack.c.h.b16 %v104
    %v213 = vunpack.c.l.b16 %v105
    %v214 = vunpack.c.h.b16 %v105
    %v215 = vunpack.c.l.b16 %v106
    %v216 = vunpack.c.h.b16 %v106
    %v217 = vunpack.c.l.b16 %v107
    %v218 = vunpack.c.h.b16 %v107
    %v219 = vunpack.c.l.b16 %v108
    %v220 = vunpack.c.h.b16 %v108
    %v221 = vunpack.c.l.b16 %v109
    %v222 = vunpack.c.h.b16 %v109
    %v223 = vunpack.c.l.b16 %v110
    %v224 = vunpack.c.h.b16 %v110
    %v225 = vunpack.c.l.b16 %v111
    %v226 = vunpack.c.h.b16 %v111
    %v227 = vunpack.c.l.b16 %v112
    %v228 = vunpack.c.h.b16 %v112
    %v229 = vunpack.c.l.b16 %v113
    %v230 = vunpack.c.h.b16 %v113
    %v231 = vunpack.c.l.b16 %v114
    %v232 = vunpack.c.h.b16 %v114
    %v233 = vpack.c.b16 %v173, %v169
    %v234 = vpack.c.b16 %v174, %v170
    %v235 = vpack.c.b16 %v175, %v171
    %v236 = vpack.c.b16 %v176, %v172
    %v237 = vpack.c.b16 %v181, %v177
    %v238 = vpack.c.b16 %v182, %v178
    %v239 = vpack.c.b16 %v183, %v179
    %v240 = vpack.c.b16 %v184, %v180
    %v241 = vpack.c.b16 %v189, %v185
    %v242 = vpack.c.b16 %v190, %v186
    %v243 = vpack.c.b16 %v191, %v187
    %v244 = vpack.c.b16 %v192, %v188
    %v245 = vpack.c.b16 %v197, %v193
    %v246 = vpack.c.b16 %v198, %v194
    %v247 = vpack.c.b16 %v199, %v195
    %v248 = vpack.c.b16 %v200, %v196
    %v249 = vpack.c.b16 %v205, %v201
    %v250 = vpack.c.b16 %v206, %v202
    %v251 = vpack.c.b16 %v207, %v203
    %v252 = vpack.c.b16 %v208, %v204
    %v253 = vpack.c.b16 %v213, %v209
    %v254 = vpack.c.b16 %v214, %v210
    %v255 = vpack.c.b16 %v215, %v211
    %v256 = vpack.c.b16 %v216, %v212
    %v257 = vpack.c.b16 %v221, %v217
    %v258 = vpack.c.b16 %v222, %v218
    %v259 = vpack.c.b16 %v223, %v219
    %v260 = vpack.c.b16 %v224, %v220
    %v261 = vpack.c.b16 %v229, %v225
    %v262 = vpack.c.b16 %v230, %v226
    %v263 = vpack.c.b16 %v231, %v227
    %v264 = vpack.c.b16 %v232, %v228
    %297 = vmatprep.subr.bf16.mxu0 %v262
    %298 = vmatpush1.bf16.msra.mxu0 %v261
    %299 = vmatprep.subr.bf16.mxu0 %v258
    %300 = vmatpush1.bf16.msra.mxu0 %v257
    %301 = vmatprep.subr.bf16.mxu0 %v254
    %302 = vmatpush1.bf16.msra.mxu0 %v253
    %303 = vmatprep.subr.bf16.mxu0 %v250
    %304 = vmatpush1.bf16.msra.mxu0 %v249
    %305 = vmatprep.subr.bf16.mxu0 %v246
    %306 = vmatpush1.bf16.msra.mxu0 %v245
    %307 = vmatprep.subr.bf16.mxu0 %v242
    %308 = vmatpush1.bf16.msra.mxu0 %v241
    %309 = vmatprep.subr.bf16.mxu0 %v238
    %310 = vmatpush1.bf16.msra.mxu0 %v237
    %311 = vmatprep.subr.bf16.mxu0 %v234
    %312 = vmatpush1.bf16.msra.mxu0 %v233
    %313 = vmatprep.subr.bf16.mxu0 0
    %314 = vmatpush2.bf16.msra.mxu0 0
    %315 = vmatprep.subr.bf16.mxu0 0
    %316 = vmatpush2.bf16.msra.mxu0 0
    %317 = vmatprep.subr.bf16.mxu0 0
    %318 = vmatpush2.bf16.msra.mxu0 0
    %319 = vmatprep.subr.bf16.mxu0 0
    %320 = vmatpush2.bf16.msra.mxu0 0
    %321 = vmatprep.subr.bf16.mxu0 0
    %322 = vmatpush2.bf16.msra.mxu0 0
    %323 = vmatprep.subr.bf16.mxu0 0
    %324 = vmatpush2.bf16.msra.mxu0 0
    %325 = vmatprep.subr.bf16.mxu0 0
    %326 = vmatpush2.bf16.msra.mxu0 0
    %327 = vmatprep.subr.bf16.mxu0 0
    %328 = vmatpush2.bf16.msra.mxu0 0
    %329 = vmatprep.mubr.bf16.mxu0 0
    %330 = vmatmul.mubr.bf16.gmra.mxu0 %v82
    %v331 = vpop.f32.mrf.mxu0
    %v332 = vadd.f32 %v120, %v331
    %v333 = vpop.f32.mrf.mxu0
    %v334 = vadd.f32 %v124, %v333
    %v335 = vpop.f32.mrf.mxu0
    %v336 = vpop.f32.mrf.mxu0
    %337 = vdwg.mxu0
    %338 = vmatprep.subr.bf16.mxu0 %v264
    %339 = vmatpush1.bf16.msra.mxu0 %v263
    %340 = vmatprep.subr.bf16.mxu0 %v260
    %341 = vmatpush1.bf16.msra.mxu0 %v259
    %342 = vmatprep.subr.bf16.mxu0 %v256
    %343 = vmatpush1.bf16.msra.mxu0 %v255
    %344 = vmatprep.subr.bf16.mxu0 %v252
    %345 = vmatpush1.bf16.msra.mxu0 %v251
    %346 = vmatprep.subr.bf16.mxu0 %v248
    %347 = vmatpush1.bf16.msra.mxu0 %v247
    %348 = vmatprep.subr.bf16.mxu0 %v244
    %349 = vmatpush1.bf16.msra.mxu0 %v243
    %350 = vmatprep.subr.bf16.mxu0 %v240
    %351 = vmatpush1.bf16.msra.mxu0 %v239
    %352 = vmatprep.subr.bf16.mxu0 %v236
    %353 = vmatpush1.bf16.msra.mxu0 %v235
    %354 = vmatprep.subr.bf16.mxu0 0
    %355 = vmatpush2.bf16.msra.mxu0 0
    %356 = vmatprep.subr.bf16.mxu0 0
    %357 = vmatpush2.bf16.msra.mxu0 0
    %358 = vmatprep.subr.bf16.mxu0 0
    %359 = vmatpush2.bf16.msra.mxu0 0
    %360 = vmatprep.subr.bf16.mxu0 0
    %361 = vmatpush2.bf16.msra.mxu0 0
    %362 = vmatprep.subr.bf16.mxu0 0
    %363 = vmatpush2.bf16.msra.mxu0 0
    %364 = vmatprep.subr.bf16.mxu0 0
    %365 = vmatpush2.bf16.msra.mxu0 0
    %366 = vmatprep.subr.bf16.mxu0 0
    %367 = vmatpush2.bf16.msra.mxu0 0
    %368 = vmatprep.subr.bf16.mxu0 0
    %369 = vmatpush2.bf16.msra.mxu0 0
    %370 = vmatprep.mubr.bf16.mxu0 0
    %371 = vmatmul.mubr.bf16.gmra.mxu0 %v82
    %v372 = vpop.f32.mrf.mxu0
    %v373 = vadd.f32 %v128, %v372
    %v374 = vpop.f32.mrf.mxu0
    %v375 = vadd.f32 %v132, %v374
    %v376 = vpop.f32.mrf.mxu0
    %v377 = vpop.f32.mrf.mxu0
    %378 = vdwg.mxu0
    %v379 = vmax.f32 %v332, 0.0
    %v380 = vmax.f32 %v334, 0.0
    %v381 = vmax.f32 %v373, 0.0
    %v382 = vmax.f32 %v375, 0.0
    %v383 = vpack.c.bf16 %v379, %v379
    %v384 = vpack.c.bf16 %v380, %v380
    %v385 = vpack.c.bf16 %v381, %v381
    %v386 = vpack.c.bf16 %v382, %v382
    %v387 = vld [vmem:[#allocation4] sm:$0xff]
    %v388 = vld [vmem:[#allocation4 + $0x8] sm:$0xff]
    %v389 = vld [vmem:[#allocation4 + $0x10] sm:$0xff]
    %v390 = vld [vmem:[#allocation4 + $0x18] sm:$0xff]
    %v391 = vld [vmem:[#allocation4 + $0x20] sm:$0xff]
    %v392 = vld [vmem:[#allocation4 + $0x28] sm:$0xff]
    %v393 = vld [vmem:[#allocation4 + $0x30] sm:$0xff]
    %v394 = vld [vmem:[#allocation4 + $0x38] sm:$0xff]
    %v395 = vld [vmem:[#allocation4 + $0x40] sm:$0xff]
    %v396 = vld [vmem:[#allocation4 + $0x48] sm:$0xff]
    %v397 = vld [vmem:[#allocation4 + $0x50] sm:$0xff]
    %v398 = vld [vmem:[#allocation4 + $0x58] sm:$0xff]
    %v399 = vld [vmem:[#allocation4 + $0x60] sm:$0xff]
    %v400 = vld [vmem:[#allocation4 + $0x68] sm:$0xff]
    %v401 = vld [vmem:[#allocation4 + $0x70] sm:$0xff]
    %v402 = vld [vmem:[#allocation4 + $0x78] sm:$0xff]
    %v403 = vld [vmem:[#allocation4 + $0x80] sm:$0xff]
    %v404 = vld [vmem:[#allocation4 + $0x88] sm:$0xff]
    %v405 = vld [vmem:[#allocation4 + $0x90] sm:$0xff]
    %v406 = vld [vmem:[#allocation4 + $0x98] sm:$0xff]
    %v407 = vld [vmem:[#allocation4 + $0xa0] sm:$0xff]
    %v408 = vld [vmem:[#allocation4 + $0xa8] sm:$0xff]
    %v409 = vld [vmem:[#allocation4 + $0xb0] sm:$0xff]
    %v410 = vld [vmem:[#allocation4 + $0xb8] sm:$0xff]
    %v411 = vld [vmem:[#allocation4 + $0xc0] sm:$0xff]
    %v412 = vld [vmem:[#allocation4 + $0xc8] sm:$0xff]
    %v413 = vld [vmem:[#allocation4 + $0xd0] sm:$0xff]
    %v414 = vld [vmem:[#allocation4 + $0xd8] sm:$0xff]
    %v415 = vld [vmem:[#allocation4 + $0xe0] sm:$0xff]
    %v416 = vld [vmem:[#allocation4 + $0xe8] sm:$0xff]
    %v417 = vld [vmem:[#allocation4 + $0xf0] sm:$0xff]
    %v418 = vld [vmem:[#allocation4 + $0xf8] sm:$0xff]
    %v419 = vld [vmem:[#allocation4 + $0x100] sm:$0xff]
    %v420 = vld [vmem:[#allocation4 + $0x108] sm:$0xff]
    %v421 = vld [vmem:[#allocation4 + $0x110] sm:$0xff]
    %v422 = vld [vmem:[#allocation4 + $0x118] sm:$0xff]
    %v423 = vld [vmem:[#allocation4 + $0x120] sm:$0xff]
    %v424 = vld [vmem:[#allocation4 + $0x128] sm:$0xff]
    %v425 = vld [vmem:[#allocation4 + $0x130] sm:$0xff]
    %v426 = vld [vmem:[#allocation4 + $0x138] sm:$0xff]
    %v427 = vld [vmem:[#allocation4 + $0x140] sm:$0xff]
    %v428 = vld [vmem:[#allocation4 + $0x148] sm:$0xff]
    %v429 = vld [vmem:[#allocation4 + $0x150] sm:$0xff]
    %v430 = vld [vmem:[#allocation4 + $0x158] sm:$0xff]
    %v431 = vld [vmem:[#allocation4 + $0x160] sm:$0xff]
    %v432 = vld [vmem:[#allocation4 + $0x168] sm:$0xff]
    %v433 = vld [vmem:[#allocation4 + $0x170] sm:$0xff]
    %v434 = vld [vmem:[#allocation4 + $0x178] sm:$0xff]
    %v435 = vld [vmem:[#allocation4 + $0x180] sm:$0xff]
    %v436 = vld [vmem:[#allocation4 + $0x188] sm:$0xff]
    %v437 = vld [vmem:[#allocation4 + $0x190] sm:$0xff]
    %v438 = vld [vmem:[#allocation4 + $0x198] sm:$0xff]
    %v439 = vld [vmem:[#allocation4 + $0x1a0] sm:$0xff]
    %v440 = vld [vmem:[#allocation4 + $0x1a8] sm:$0xff]
    %v441 = vld [vmem:[#allocation4 + $0x1b0] sm:$0xff]
    %v442 = vld [vmem:[#allocation4 + $0x1b8] sm:$0xff]
    %v443 = vld [vmem:[#allocation4 + $0x1c0] sm:$0xff]
    %v444 = vld [vmem:[#allocation4 + $0x1c8] sm:$0xff]
    %v445 = vld [vmem:[#allocation4 + $0x1d0] sm:$0xff]
    %v446 = vld [vmem:[#allocation4 + $0x1d8] sm:$0xff]
    %v447 = vld [vmem:[#allocation4 + $0x1e0] sm:$0xff]
    %v448 = vld [vmem:[#allocation4 + $0x1e8] sm:$0xff]
    %v449 = vld [vmem:[#allocation4 + $0x1f0] sm:$0xff]
    %v450 = vld [vmem:[#allocation4 + $0x1f8] sm:$0xff]
    %v451 = vld [vmem:[%s6 + $0x4] sm:$0x3]
    %v453 = vlaneseq
    %v454 = vshrl.u32 %v453, 7
    %v455 = vsub.s32 0, %v454
    %v456 = vrot.slane %v451, %v455
    %v457 = vlaneseq
    %v458 = vshrl.u32 %v457, 7
    %v459 = vsub.s32 1, %v458
    %v460 = vrot.slane %v451, %v459
    %v527 = vunpack.c.l.b16 %v387
    %v528 = vunpack.c.h.b16 %v387
    %v529 = vunpack.c.l.b16 %v388
    %v530 = vunpack.c.h.b16 %v388
    %v531 = vunpack.c.l.b16 %v389
    %v532 = vunpack.c.h.b16 %v389
    %v533 = vunpack.c.l.b16 %v390
    %v534 = vunpack.c.h.b16 %v390
    %v535 = vunpack.c.l.b16 %v391
    %v536 = vunpack.c.h.b16 %v391
    %v537 = vunpack.c.l.b16 %v392
    %v538 = vunpack.c.h.b16 %v392
    %v539 = vunpack.c.l.b16 %v393
    %v540 = vunpack.c.h.b16 %v393
    %v541 = vunpack.c.l.b16 %v394
    %v542 = vunpack.c.h.b16 %v394
    %v543 = vunpack.c.l.b16 %v395
    %v544 = vunpack.c.h.b16 %v395
    %v545 = vunpack.c.l.b16 %v396
    %v546 = vunpack.c.h.b16 %v396
    %v547 = vunpack.c.l.b16 %v397
    %v548 = vunpack.c.h.b16 %v397
    %v549 = vunpack.c.l.b16 %v398
    %v550 = vunpack.c.h.b16 %v398
    %v551 = vunpack.c.l.b16 %v399
    %v552 = vunpack.c.h.b16 %v399
    %v553 = vunpack.c.l.b16 %v400
    %v554 = vunpack.c.h.b16 %v400
    %v555 = vunpack.c.l.b16 %v401
    %v556 = vunpack.c.h.b16 %v401
    %v557 = vunpack.c.l.b16 %v402
    %v558 = vunpack.c.h.b16 %v402
    %v559 = vunpack.c.l.b16 %v403
    %v560 = vunpack.c.h.b16 %v403
    %v561 = vunpack.c.l.b16 %v404
    %v562 = vunpack.c.h.b16 %v404
    %v563 = vunpack.c.l.b16 %v405
    %v564 = vunpack.c.h.b16 %v405
    %v565 = vunpack.c.l.b16 %v406
    %v566 = vunpack.c.h.b16 %v406
    %v567 = vunpack.c.l.b16 %v407
    %v568 = vunpack.c.h.b16 %v407
    %v569 = vunpack.c.l.b16 %v408
    %v570 = vunpack.c.h.b16 %v408
    %v571 = vunpack.c.l.b16 %v409
    %v572 = vunpack.c.h.b16 %v409
    %v573 = vunpack.c.l.b16 %v410
    %v574 = vunpack.c.h.b16 %v410
    %v575 = vunpack.c.l.b16 %v411
    %v576 = vunpack.c.h.b16 %v411
    %v577 = vunpack.c.l.b16 %v412
    %v578 = vunpack.c.h.b16 %v412
    %v579 = vunpack.c.l.b16 %v413
    %v580 = vunpack.c.h.b16 %v413
    %v581 = vunpack.c.l.b16 %v414
    %v582 = vunpack.c.h.b16 %v414
    %v583 = vunpack.c.l.b16 %v415
    %v584 = vunpack.c.h.b16 %v415
    %v585 = vunpack.c.l.b16 %v416
    %v586 = vunpack.c.h.b16 %v416
    %v587 = vunpack.c.l.b16 %v417
    %v588 = vunpack.c.h.b16 %v417
    %v589 = vunpack.c.l.b16 %v418
    %v590 = vunpack.c.h.b16 %v418
    %v591 = vunpack.c.l.b16 %v419
    %v592 = vunpack.c.h.b16 %v419
    %v593 = vunpack.c.l.b16 %v420
    %v594 = vunpack.c.h.b16 %v420
    %v595 = vunpack.c.l.b16 %v421
    %v596 = vunpack.c.h.b16 %v421
    %v597 = vunpack.c.l.b16 %v422
    %v598 = vunpack.c.h.b16 %v422
    %v599 = vunpack.c.l.b16 %v423
    %v600 = vunpack.c.h.b16 %v423
    %v601 = vunpack.c.l.b16 %v424
    %v602 = vunpack.c.h.b16 %v424
    %v603 = vunpack.c.l.b16 %v425
    %v604 = vunpack.c.h.b16 %v425
    %v605 = vunpack.c.l.b16 %v426
    %v606 = vunpack.c.h.b16 %v426
    %v607 = vunpack.c.l.b16 %v427
    %v608 = vunpack.c.h.b16 %v427
    %v609 = vunpack.c.l.b16 %v428
    %v610 = vunpack.c.h.b16 %v428
    %v611 = vunpack.c.l.b16 %v429
    %v612 = vunpack.c.h.b16 %v429
    %v613 = vunpack.c.l.b16 %v430
    %v614 = vunpack.c.h.b16 %v430
    %v615 = vunpack.c.l.b16 %v431
    %v616 = vunpack.c.h.b16 %v431
    %v617 = vunpack.c.l.b16 %v432
    %v618 = vunpack.c.h.b16 %v432
    %v619 = vunpack.c.l.b16 %v433
    %v620 = vunpack.c.h.b16 %v433
    %v621 = vunpack.c.l.b16 %v434
    %v622 = vunpack.c.h.b16 %v434
    %v623 = vunpack.c.l.b16 %v435
    %v624 = vunpack.c.h.b16 %v435
    %v625 = vunpack.c.l.b16 %v436
    %v626 = vunpack.c.h.b16 %v436
    %v627 = vunpack.c.l.b16 %v437
    %v628 = vunpack.c.h.b16 %v437
    %v629 = vunpack.c.l.b16 %v438
    %v630 = vunpack.c.h.b16 %v438
    %v631 = vunpack.c.l.b16 %v439
    %v632 = vunpack.c.h.b16 %v439
    %v633 = vunpack.c.l.b16 %v440
    %v634 = vunpack.c.h.b16 %v440
    %v635 = vunpack.c.l.b16 %v441
    %v636 = vunpack.c.h.b16 %v441
    %v637 = vunpack.c.l.b16 %v442
    %v638 = vunpack.c.h.b16 %v442
    %v639 = vunpack.c.l.b16 %v443
    %v640 = vunpack.c.h.b16 %v443
    %v641 = vunpack.c.l.b16 %v444
    %v642 = vunpack.c.h.b16 %v444
    %v643 = vunpack.c.l.b16 %v445
    %v644 = vunpack.c.h.b16 %v445
    %v645 = vunpack.c.l.b16 %v446
    %v646 = vunpack.c.h.b16 %v446
    %v647 = vunpack.c.l.b16 %v447
    %v648 = vunpack.c.h.b16 %v447
    %v649 = vunpack.c.l.b16 %v448
    %v650 = vunpack.c.h.b16 %v448
    %v651 = vunpack.c.l.b16 %v449
    %v652 = vunpack.c.h.b16 %v449
    %v653 = vunpack.c.l.b16 %v450
    %v654 = vunpack.c.h.b16 %v450
    %v655 = vpack.c.b16 %v529, %v527
    %v656 = vpack.c.b16 %v530, %v528
    %v657 = vpack.c.b16 %v533, %v531
    %v658 = vpack.c.b16 %v534, %v532
    %v659 = vpack.c.b16 %v537, %v535
    %v660 = vpack.c.b16 %v538, %v536
    %v661 = vpack.c.b16 %v541, %v539
    %v662 = vpack.c.b16 %v542, %v540
    %v663 = vpack.c.b16 %v545, %v543
    %v664 = vpack.c.b16 %v546, %v544
    %v665 = vpack.c.b16 %v549, %v547
    %v666 = vpack.c.b16 %v550, %v548
    %v667 = vpack.c.b16 %v553, %v551
    %v668 = vpack.c.b16 %v554, %v552
    %v669 = vpack.c.b16 %v557, %v555
    %v670 = vpack.c.b16 %v558, %v556
    %v671 = vpack.c.b16 %v561, %v559
    %v672 = vpack.c.b16 %v562, %v560
    %v673 = vpack.c.b16 %v565, %v563
    %v674 = vpack.c.b16 %v566, %v564
    %v675 = vpack.c.b16 %v569, %v567
    %v676 = vpack.c.b16 %v570, %v568
    %v677 = vpack.c.b16 %v573, %v571
    %v678 = vpack.c.b16 %v574, %v572
    %v679 = vpack.c.b16 %v577, %v575
    %v680 = vpack.c.b16 %v578, %v576
    %v681 = vpack.c.b16 %v581, %v579
    %v682 = vpack.c.b16 %v582, %v580
    %v683 = vpack.c.b16 %v585, %v583
    %v684 = vpack.c.b16 %v586, %v584
    %v685 = vpack.c.b16 %v589, %v587
    %v686 = vpack.c.b16 %v590, %v588
    %v687 = vpack.c.b16 %v593, %v591
    %v688 = vpack.c.b16 %v594, %v592
    %v689 = vpack.c.b16 %v597, %v595
    %v690 = vpack.c.b16 %v598, %v596
    %v691 = vpack.c.b16 %v601, %v599
    %v692 = vpack.c.b16 %v602, %v600
    %v693 = vpack.c.b16 %v605, %v603
    %v694 = vpack.c.b16 %v606, %v604
    %v695 = vpack.c.b16 %v609, %v607
    %v696 = vpack.c.b16 %v610, %v608
    %v697 = vpack.c.b16 %v613, %v611
    %v698 = vpack.c.b16 %v614, %v612
    %v699 = vpack.c.b16 %v617, %v615
    %v700 = vpack.c.b16 %v618, %v616
    %v701 = vpack.c.b16 %v621, %v619
    %v702 = vpack.c.b16 %v622, %v620
    %v703 = vpack.c.b16 %v625, %v623
    %v704 = vpack.c.b16 %v626, %v624
    %v705 = vpack.c.b16 %v629, %v627
    %v706 = vpack.c.b16 %v630, %v628
    %v707 = vpack.c.b16 %v633, %v631
    %v708 = vpack.c.b16 %v634, %v632
    %v709 = vpack.c.b16 %v637, %v635
    %v710 = vpack.c.b16 %v638, %v636
    %v711 = vpack.c.b16 %v641, %v639
    %v712 = vpack.c.b16 %v642, %v640
    %v713 = vpack.c.b16 %v645, %v643
    %v714 = vpack.c.b16 %v646, %v644
    %v715 = vpack.c.b16 %v649, %v647
    %v716 = vpack.c.b16 %v650, %v648
    %v717 = vpack.c.b16 %v653, %v651
    %v718 = vpack.c.b16 %v654, %v652
    %783 = vmatprep.subr.bf16.mxu0 %v670
    %784 = vmatpush1.bf16.msra.mxu0 %v669
    %785 = vmatprep.subr.bf16.mxu0 %v668
    %786 = vmatpush1.bf16.msra.mxu0 %v667
    %787 = vmatprep.subr.bf16.mxu0 %v666
    %788 = vmatpush1.bf16.msra.mxu0 %v665
    %789 = vmatprep.subr.bf16.mxu0 %v664
    %790 = vmatpush1.bf16.msra.mxu0 %v663
    %791 = vmatprep.subr.bf16.mxu0 %v662
    %792 = vmatpush1.bf16.msra.mxu0 %v661
    %793 = vmatprep.subr.bf16.mxu0 %v660
    %794 = vmatpush1.bf16.msra.mxu0 %v659
    %795 = vmatprep.subr.bf16.mxu0 %v658
    %796 = vmatpush1.bf16.msra.mxu0 %v657
    %797 = vmatprep.subr.bf16.mxu0 %v656
    %798 = vmatpush1.bf16.msra.mxu0 %v655
    %799 = vmatprep.subr.bf16.mxu0 %v686
    %800 = vmatpush2.bf16.msra.mxu0 %v685
    %801 = vmatprep.subr.bf16.mxu0 %v684
    %802 = vmatpush2.bf16.msra.mxu0 %v683
    %803 = vmatprep.subr.bf16.mxu0 %v682
    %804 = vmatpush2.bf16.msra.mxu0 %v681
    %805 = vmatprep.subr.bf16.mxu0 %v680
    %806 = vmatpush2.bf16.msra.mxu0 %v679
    %807 = vmatprep.subr.bf16.mxu0 %v678
    %808 = vmatpush2.bf16.msra.mxu0 %v677
    %809 = vmatprep.subr.bf16.mxu0 %v676
    %810 = vmatpush2.bf16.msra.mxu0 %v675
    %811 = vmatprep.subr.bf16.mxu0 %v674
    %812 = vmatpush2.bf16.msra.mxu0 %v673
    %813 = vmatprep.subr.bf16.mxu0 %v672
    %814 = vmatpush2.bf16.msra.mxu0 %v671
    %815 = vmatprep.mubr.bf16.mxu0 %v384
    %816 = vmatmul.mubr.bf16.gmra.mxu0 %v383
    %v817 = vpop.f32.mrf.mxu0
    %v818 = vadd.f32 %v456, %v817
    %v819 = vpop.f32.mrf.mxu0
    %v820 = vadd.f32 %v460, %v819
    %v821 = vpop.f32.mrf.mxu0
    %v822 = vpop.f32.mrf.mxu0
    %823 = vdwg.mxu0
    %824 = vmatprep.subr.bf16.mxu0 %v702
    %825 = vmatpush1.bf16.msra.mxu0 %v701
    %826 = vmatprep.subr.bf16.mxu0 %v700
    %827 = vmatpush1.bf16.msra.mxu0 %v699
    %828 = vmatprep.subr.bf16.mxu0 %v698
    %829 = vmatpush1.bf16.msra.mxu0 %v697
    %830 = vmatprep.subr.bf16.mxu0 %v696
    %831 = vmatpush1.bf16.msra.mxu0 %v695
    %832 = vmatprep.subr.bf16.mxu0 %v694
    %833 = vmatpush1.bf16.msra.mxu0 %v693
    %834 = vmatprep.subr.bf16.mxu0 %v692
    %835 = vmatpush1.bf16.msra.mxu0 %v691
    %836 = vmatprep.subr.bf16.mxu0 %v690
    %837 = vmatpush1.bf16.msra.mxu0 %v689
    %838 = vmatprep.subr.bf16.mxu0 %v688
    %839 = vmatpush1.bf16.msra.mxu0 %v687
    %840 = vmatprep.subr.bf16.mxu0 %v718
    %841 = vmatpush2.bf16.msra.mxu0 %v717
    %842 = vmatprep.subr.bf16.mxu0 %v716
    %843 = vmatpush2.bf16.msra.mxu0 %v715
    %844 = vmatprep.subr.bf16.mxu0 %v714
    %845 = vmatpush2.bf16.msra.mxu0 %v713
    %846 = vmatprep.subr.bf16.mxu0 %v712
    %847 = vmatpush2.bf16.msra.mxu0 %v711
    %848 = vmatprep.subr.bf16.mxu0 %v710
    %849 = vmatpush2.bf16.msra.mxu0 %v709
    %850 = vmatprep.subr.bf16.mxu0 %v708
    %851 = vmatpush2.bf16.msra.mxu0 %v707
    %852 = vmatprep.subr.bf16.mxu0 %v706
    %853 = vmatpush2.bf16.msra.mxu0 %v705
    %854 = vmatprep.subr.bf16.mxu0 %v704
    %855 = vmatpush2.bf16.msra.mxu0 %v703
    %856 = vmatprep.mubr.bf16.mxu0 %v386
    %857 = vmatmul.mubr.bf16.gmra.mxu0 %v385
    %v858 = vpop.f32.mrf.mxu0
    %v859 = vadd.f32 %v818, %v858
    %v860 = vpop.f32.mrf.mxu0
    %v861 = vadd.f32 %v820, %v860
    %v862 = vpop.f32.mrf.mxu0
    %v863 = vpop.f32.mrf.mxu0
    %864 = vdwg.mxu0
    %v865 = vmax.f32 %v859, 0.0
    %v866 = vmax.f32 %v861, 0.0
    %v867 = vpack.c.bf16 %v865, %v865
    %v868 = vpack.c.bf16 %v866, %v866
    %v869 = vld [vmem:[%s3] sm:$0xf]
    %v870 = vld [vmem:[%s3 + $0x4] sm:$0xf]
    %v871 = vld [vmem:[%s3 + $0x8] sm:$0xf]
    %v872 = vld [vmem:[%s3 + $0xc] sm:$0xf]
    %v873 = vld [vmem:[%s3 + $0x10] sm:$0xf]
    %v874 = vld [vmem:[%s3 + $0x14] sm:$0xf]
    %v875 = vld [vmem:[%s3 + $0x18] sm:$0xf]
    %v876 = vld [vmem:[%s3 + $0x1c] sm:$0xf]
    %v877 = vld [vmem:[%s3 + $0x20] sm:$0xf]
    %v878 = vld [vmem:[%s3 + $0x24] sm:$0xf]
    %v879 = vld [vmem:[%s3 + $0x28] sm:$0xf]
    %v880 = vld [vmem:[%s3 + $0x2c] sm:$0xf]
    %v881 = vld [vmem:[%s3 + $0x30] sm:$0xf]
    %v882 = vld [vmem:[%s3 + $0x34] sm:$0xf]
    %v883 = vld [vmem:[%s3 + $0x38] sm:$0xf]
    %v884 = vld [vmem:[%s3 + $0x3c] sm:$0xf]
    %v885 = vld [vmem:[%s3 + $0x40] sm:$0xf]
    %v886 = vld [vmem:[%s3 + $0x44] sm:$0xf]
    %v887 = vld [vmem:[%s3 + $0x48] sm:$0xf]
    %v888 = vld [vmem:[%s3 + $0x4c] sm:$0xf]
    %v889 = vld [vmem:[%s3 + $0x50] sm:$0xf]
    %v890 = vld [vmem:[%s3 + $0x54] sm:$0xf]
    %v891 = vld [vmem:[%s3 + $0x58] sm:$0xf]
    %v892 = vld [vmem:[%s3 + $0x5c] sm:$0xf]
    %v893 = vld [vmem:[%s3 + $0x60] sm:$0xf]
    %v894 = vld [vmem:[%s3 + $0x64] sm:$0xf]
    %v895 = vld [vmem:[%s3 + $0x68] sm:$0xf]
    %v896 = vld [vmem:[%s3 + $0x6c] sm:$0xf]
    %v897 = vld [vmem:[%s3 + $0x70] sm:$0xf]
    %v898 = vld [vmem:[%s3 + $0x74] sm:$0xf]
    %v899 = vld [vmem:[%s3 + $0x78] sm:$0xf]
    %v900 = vld [vmem:[%s3 + $0x7c] sm:$0xf]
    %v901 = vld [vmem:[%s6 + $0x6] sm:$0x1]
    %v903 = vlaneseq
    %v904 = vshrl.u32 %v903, 7
    %v905 = vsub.s32 0, %v904
    %v906 = vrot.slane %v901, %v905
    %v940 = vunpack.c.l.b16 %v869
    %v941 = vunpack.c.l.b16 %v870
    %v942 = vunpack.c.l.b16 %v871
    %v943 = vunpack.c.l.b16 %v872
    %v944 = vunpack.c.l.b16 %v873
    %v945 = vunpack.c.l.b16 %v874
    %v946 = vunpack.c.l.b16 %v875
    %v947 = vunpack.c.l.b16 %v876
    %v948 = vunpack.c.l.b16 %v877
    %v949 = vunpack.c.l.b16 %v878
    %v950 = vunpack.c.l.b16 %v879
    %v951 = vunpack.c.l.b16 %v880
    %v952 = vunpack.c.l.b16 %v881
    %v953 = vunpack.c.l.b16 %v882
    %v954 = vunpack.c.l.b16 %v883
    %v955 = vunpack.c.l.b16 %v884
    %v956 = vunpack.c.l.b16 %v885
    %v957 = vunpack.c.l.b16 %v886
    %v958 = vunpack.c.l.b16 %v887
    %v959 = vunpack.c.l.b16 %v888
    %v960 = vunpack.c.l.b16 %v889
    %v961 = vunpack.c.l.b16 %v890
    %v962 = vunpack.c.l.b16 %v891
    %v963 = vunpack.c.l.b16 %v892
    %v964 = vunpack.c.l.b16 %v893
    %v965 = vunpack.c.l.b16 %v894
    %v966 = vunpack.c.l.b16 %v895
    %v967 = vunpack.c.l.b16 %v896
    %v968 = vunpack.c.l.b16 %v897
    %v969 = vunpack.c.l.b16 %v898
    %v970 = vunpack.c.l.b16 %v899
    %v971 = vunpack.c.l.b16 %v900
    %v972 = vpack.c.b16 %v941, %v940
    %v973 = vpack.c.b16 %v943, %v942
    %v974 = vpack.c.b16 %v945, %v944
    %v975 = vpack.c.b16 %v947, %v946
    %v976 = vpack.c.b16 %v949, %v948
    %v977 = vpack.c.b16 %v951, %v950
    %v978 = vpack.c.b16 %v953, %v952
    %v979 = vpack.c.b16 %v955, %v954
    %v980 = vpack.c.b16 %v957, %v956
    %v981 = vpack.c.b16 %v959, %v958
    %v982 = vpack.c.b16 %v961, %v960
    %v983 = vpack.c.b16 %v963, %v962
    %v984 = vpack.c.b16 %v965, %v964
    %v985 = vpack.c.b16 %v967, %v966
    %v986 = vpack.c.b16 %v969, %v968
    %v987 = vpack.c.b16 %v971, %v970
    %1004 = vmatprep.subr.bf16.mxu0 0
    %1005 = vmatpush1.bf16.msra.mxu0 %v979
    %1006 = vmatprep.subr.bf16.mxu0 0
    %1007 = vmatpush1.bf16.msra.mxu0 %v978
    %1008 = vmatprep.subr.bf16.mxu0 0
    %1009 = vmatpush1.bf16.msra.mxu0 %v977
    %1010 = vmatprep.subr.bf16.mxu0 0
    %1011 = vmatpush1.bf16.msra.mxu0 %v976
    %1012 = vmatprep.subr.bf16.mxu0 0
    %1013 = vmatpush1.bf16.msra.mxu0 %v975
    %1014 = vmatprep.subr.bf16.mxu0 0
    %1015 = vmatpush1.bf16.msra.mxu0 %v974
    %1016 = vmatprep.subr.bf16.mxu0 0
    %1017 = vmatpush1.bf16.msra.mxu0 %v973
    %1018 = vmatprep.subr.bf16.mxu0 0
    %1019 = vmatpush1.bf16.msra.mxu0 %v972
    %1020 = vmatprep.subr.bf16.mxu0 0
    %1021 = vmatpush2.bf16.msra.mxu0 %v987
    %1022 = vmatprep.subr.bf16.mxu0 0
    %1023 = vmatpush2.bf16.msra.mxu0 %v986
    %1024 = vmatprep.subr.bf16.mxu0 0
    %1025 = vmatpush2.bf16.msra.mxu0 %v985
    %1026 = vmatprep.subr.bf16.mxu0 0
    %1027 = vmatpush2.bf16.msra.mxu0 %v984
    %1028 = vmatprep.subr.bf16.mxu0 0
    %1029 = vmatpush2.bf16.msra.mxu0 %v983
    %1030 = vmatprep.subr.bf16.mxu0 0
    %1031 = vmatpush2.bf16.msra.mxu0 %v982
    %1032 = vmatprep.subr.bf16.mxu0 0
    %1033 = vmatpush2.bf16.msra.mxu0 %v981
    %1034 = vmatprep.subr.bf16.mxu0 0
    %1035 = vmatpush2.bf16.msra.mxu0 %v980
    %1036 = vmatprep.mubr.bf16.mxu0 %v868
    %1037 = vmatmul.mubr.bf16.gmra.mxu0 %v867
    %v1038 = vpop.f32.mrf.mxu0
    %v1039 = vadd.f32 %v906, %v1038
    %v1040 = vpop.f32.mrf.mxu0
    %v1041 = vpop.f32.mrf.mxu0
    %v1042 = vpop.f32.mrf.mxu0
    %1043 = vdwg.mxu0
    %v1044 = vmax.f32 %v1039, 0.0
    %v1045 = vpack.c.bf16 %v1044, %v1044
    %v1046 = vld [vmem:[#allocation6] sm:$0xff]
    %v1047 = vld [vmem:[#allocation6 + $0x8] sm:$0xff]
    %v1048 = vld [vmem:[#allocation6 + $0x10] sm:$0xff]
    %v1049 = vld [vmem:[#allocation6 + $0x18] sm:$0xff]
    %v1050 = vld [vmem:[#allocation6 + $0x20] sm:$0xff]
    %v1051 = vld [vmem:[#allocation6 + $0x28] sm:$0xff]
    %v1052 = vld [vmem:[#allocation6 + $0x30] sm:$0xff]
    %v1053 = vld [vmem:[#allocation6 + $0x38] sm:$0xff]
    %v1054 = vld [vmem:[#allocation6 + $0x40] sm:$0xff]
    %v1055 = vld [vmem:[#allocation6 + $0x48] sm:$0xff]
    %v1056 = vld [vmem:[#allocation6 + $0x50] sm:$0xff]
    %v1057 = vld [vmem:[#allocation6 + $0x58] sm:$0xff]
    %v1058 = vld [vmem:[#allocation6 + $0x60] sm:$0xff]
    %v1059 = vld [vmem:[#allocation6 + $0x68] sm:$0xff]
    %v1060 = vld [vmem:[#allocation6 + $0x70] sm:$0xff]
    %v1061 = vld [vmem:[#allocation6 + $0x78] sm:$0xff]
    %v1062 = vld [vmem:[#allocation6 + $0x80] sm:$0xff]
    %v1063 = vld [vmem:[#allocation6 + $0x88] sm:$0xff]
    %v1064 = vld [vmem:[#allocation6 + $0x90] sm:$0xff]
    %v1065 = vld [vmem:[#allocation6 + $0x98] sm:$0xff]
    %v1066 = vld [vmem:[#allocation6 + $0xa0] sm:$0xff]
    %v1067 = vld [vmem:[#allocation6 + $0xa8] sm:$0xff]
    %v1068 = vld [vmem:[#allocation6 + $0xb0] sm:$0xff]
    %v1069 = vld [vmem:[#allocation6 + $0xb8] sm:$0xff]
    %v1070 = vld [vmem:[#allocation6 + $0xc0] sm:$0xff]
    %v1071 = vld [vmem:[#allocation6 + $0xc8] sm:$0xff]
    %v1072 = vld [vmem:[#allocation6 + $0xd0] sm:$0xff]
    %v1073 = vld [vmem:[#allocation6 + $0xd8] sm:$0xff]
    %v1074 = vld [vmem:[#allocation6 + $0xe0] sm:$0xff]
    %v1075 = vld [vmem:[#allocation6 + $0xe8] sm:$0xff]
    %v1076 = vld [vmem:[#allocation6 + $0xf0] sm:$0xff]
    %v1077 = vld [vmem:[#allocation6 + $0xf8] sm:$0xff]
    %v1078 = vld [vmem:[%s6 + $0x7] sm:$0xf]
    %v1080 = vlaneseq
    %v1081 = vshrl.u32 %v1080, 7
    %v1082 = vsub.s32 0, %v1081
    %v1083 = vrot.slane %v1078, %v1082
    %v1084 = vlaneseq
    %v1085 = vshrl.u32 %v1084, 7
    %v1086 = vsub.s32 1, %v1085
    %v1087 = vrot.slane %v1078, %v1086
    %v1088 = vlaneseq
    %v1089 = vshrl.u32 %v1088, 7
    %v1090 = vsub.s32 2, %v1089
    %v1091 = vrot.slane %v1078, %v1090
    %v1092 = vlaneseq
    %v1093 = vshrl.u32 %v1092, 7
    %v1094 = vsub.s32 3, %v1093
    %v1095 = vrot.slane %v1078, %v1094
    %v1132 = vunpack.c.l.b16 %v1046
    %v1133 = vunpack.c.h.b16 %v1046
    %v1134 = vunpack.c.l.b16 %v1047
    %v1135 = vunpack.c.h.b16 %v1047
    %v1136 = vunpack.c.l.b16 %v1048
    %v1137 = vunpack.c.h.b16 %v1048
    %v1138 = vunpack.c.l.b16 %v1049
    %v1139 = vunpack.c.h.b16 %v1049
    %v1140 = vunpack.c.l.b16 %v1050
    %v1141 = vunpack.c.h.b16 %v1050
    %v1142 = vunpack.c.l.b16 %v1051
    %v1143 = vunpack.c.h.b16 %v1051
    %v1144 = vunpack.c.l.b16 %v1052
    %v1145 = vunpack.c.h.b16 %v1052
    %v1146 = vunpack.c.l.b16 %v1053
    %v1147 = vunpack.c.h.b16 %v1053
    %v1148 = vunpack.c.l.b16 %v1054
    %v1149 = vunpack.c.h.b16 %v1054
    %v1150 = vunpack.c.l.b16 %v1055
    %v1151 = vunpack.c.h.b16 %v1055
    %v1152 = vunpack.c.l.b16 %v1056
    %v1153 = vunpack.c.h.b16 %v1056
    %v1154 = vunpack.c.l.b16 %v1057
    %v1155 = vunpack.c.h.b16 %v1057
    %v1156 = vunpack.c.l.b16 %v1058
    %v1157 = vunpack.c.h.b16 %v1058
    %v1158 = vunpack.c.l.b16 %v1059
    %v1159 = vunpack.c.h.b16 %v1059
    %v1160 = vunpack.c.l.b16 %v1060
    %v1161 = vunpack.c.h.b16 %v1060
    %v1162 = vunpack.c.l.b16 %v1061
    %v1163 = vunpack.c.h.b16 %v1061
    %v1164 = vunpack.c.l.b16 %v1062
    %v1165 = vunpack.c.h.b16 %v1062
    %v1166 = vunpack.c.l.b16 %v1063
    %v1167 = vunpack.c.h.b16 %v1063
    %v1168 = vunpack.c.l.b16 %v1064
    %v1169 = vunpack.c.h.b16 %v1064
    %v1170 = vunpack.c.l.b16 %v1065
    %v1171 = vunpack.c.h.b16 %v1065
    %v1172 = vunpack.c.l.b16 %v1066
    %v1173 = vunpack.c.h.b16 %v1066
    %v1174 = vunpack.c.l.b16 %v1067
    %v1175 = vunpack.c.h.b16 %v1067
    %v1176 = vunpack.c.l.b16 %v1068
    %v1177 = vunpack.c.h.b16 %v1068
    %v1178 = vunpack.c.l.b16 %v1069
    %v1179 = vunpack.c.h.b16 %v1069
    %v1180 = vunpack.c.l.b16 %v1070
    %v1181 = vunpack.c.h.b16 %v1070
    %v1182 = vunpack.c.l.b16 %v1071
    %v1183 = vunpack.c.h.b16 %v1071
    %v1184 = vunpack.c.l.b16 %v1072
    %v1185 = vunpack.c.h.b16 %v1072
    %v1186 = vunpack.c.l.b16 %v1073
    %v1187 = vunpack.c.h.b16 %v1073
    %v1188 = vunpack.c.l.b16 %v1074
    %v1189 = vunpack.c.h.b16 %v1074
    %v1190 = vunpack.c.l.b16 %v1075
    %v1191 = vunpack.c.h.b16 %v1075
    %v1192 = vunpack.c.l.b16 %v1076
    %v1193 = vunpack.c.h.b16 %v1076
    %v1194 = vunpack.c.l.b16 %v1077
    %v1195 = vunpack.c.h.b16 %v1077
    %v1196 = vpack.c.b16 %v1136, %v1132
    %v1197 = vpack.c.b16 %v1137, %v1133
    %v1198 = vpack.c.b16 %v1138, %v1134
    %v1199 = vpack.c.b16 %v1139, %v1135
    %v1200 = vpack.c.b16 %v1144, %v1140
    %v1201 = vpack.c.b16 %v1145, %v1141
    %v1202 = vpack.c.b16 %v1146, %v1142
    %v1203 = vpack.c.b16 %v1147, %v1143
    %v1204 = vpack.c.b16 %v1152, %v1148
    %v1205 = vpack.c.b16 %v1153, %v1149
    %v1206 = vpack.c.b16 %v1154, %v1150
    %v1207 = vpack.c.b16 %v1155, %v1151
    %v1208 = vpack.c.b16 %v1160, %v1156
    %v1209 = vpack.c.b16 %v1161, %v1157
    %v1210 = vpack.c.b16 %v1162, %v1158
    %v1211 = vpack.c.b16 %v1163, %v1159
    %v1212 = vpack.c.b16 %v1168, %v1164
    %v1213 = vpack.c.b16 %v1169, %v1165
    %v1214 = vpack.c.b16 %v1170, %v1166
    %v1215 = vpack.c.b16 %v1171, %v1167
    %v1216 = vpack.c.b16 %v1176, %v1172
    %v1217 = vpack.c.b16 %v1177, %v1173
    %v1218 = vpack.c.b16 %v1178, %v1174
    %v1219 = vpack.c.b16 %v1179, %v1175
    %v1220 = vpack.c.b16 %v1184, %v1180
    %v1221 = vpack.c.b16 %v1185, %v1181
    %v1222 = vpack.c.b16 %v1186, %v1182
    %v1223 = vpack.c.b16 %v1187, %v1183
    %v1224 = vpack.c.b16 %v1192, %v1188
    %v1225 = vpack.c.b16 %v1193, %v1189
    %v1226 = vpack.c.b16 %v1194, %v1190
    %v1227 = vpack.c.b16 %v1195, %v1191
    %1260 = vmatprep.subr.bf16.mxu0 %v1225
    %1261 = vmatpush1.bf16.msra.mxu0 %v1224
    %1262 = vmatprep.subr.bf16.mxu0 %v1221
    %1263 = vmatpush1.bf16.msra.mxu0 %v1220
    %1264 = vmatprep.subr.bf16.mxu0 %v1217
    %1265 = vmatpush1.bf16.msra.mxu0 %v1216
    %1266 = vmatprep.subr.bf16.mxu0 %v1213
    %1267 = vmatpush1.bf16.msra.mxu0 %v1212
    %1268 = vmatprep.subr.bf16.mxu0 %v1209
    %1269 = vmatpush1.bf16.msra.mxu0 %v1208
    %1270 = vmatprep.subr.bf16.mxu0 %v1205
    %1271 = vmatpush1.bf16.msra.mxu0 %v1204
    %1272 = vmatprep.subr.bf16.mxu0 %v1201
    %1273 = vmatpush1.bf16.msra.mxu0 %v1200
    %1274 = vmatprep.subr.bf16.mxu0 %v1197
    %1275 = vmatpush1.bf16.msra.mxu0 %v1196
    %1276 = vmatprep.subr.bf16.mxu0 0
    %1277 = vmatpush2.bf16.msra.mxu0 0
    %1278 = vmatprep.subr.bf16.mxu0 0
    %1279 = vmatpush2.bf16.msra.mxu0 0
    %1280 = vmatprep.subr.bf16.mxu0 0
    %1281 = vmatpush2.bf16.msra.mxu0 0
    %1282 = vmatprep.subr.bf16.mxu0 0
    %1283 = vmatpush2.bf16.msra.mxu0 0
    %1284 = vmatprep.subr.bf16.mxu0 0
    %1285 = vmatpush2.bf16.msra.mxu0 0
    %1286 = vmatprep.subr.bf16.mxu0 0
    %1287 = vmatpush2.bf16.msra.mxu0 0
    %1288 = vmatprep.subr.bf16.mxu0 0
    %1289 = vmatpush2.bf16.msra.mxu0 0
    %1290 = vmatprep.subr.bf16.mxu0 0
    %1291 = vmatpush2.bf16.msra.mxu0 0
    %1292 = vmatprep.mubr.bf16.mxu0 0
    %1293 = vmatmul.mubr.bf16.gmra.mxu0 %v1045
    %v1294 = vpop.f32.mrf.mxu0
    %v1295 = vadd.f32 %v1083, %v1294
    %v1296 = vpop.f32.mrf.mxu0
    %v1297 = vadd.f32 %v1087, %v1296
    %v1298 = vpop.f32.mrf.mxu0
    %v1299 = vpop.f32.mrf.mxu0
    %1300 = vdwg.mxu0
    %1301 = vmatprep.subr.bf16.mxu0 %v1227
    %1302 = vmatpush1.bf16.msra.mxu0 %v1226
    %1303 = vmatprep.subr.bf16.mxu0 %v1223
    %1304 = vmatpush1.bf16.msra.mxu0 %v1222
    %1305 = vmatprep.subr.bf16.mxu0 %v1219
    %1306 = vmatpush1.bf16.msra.mxu0 %v1218
    %1307 = vmatprep.subr.bf16.mxu0 %v1215
    %1308 = vmatpush1.bf16.msra.mxu0 %v1214
    %1309 = vmatprep.subr.bf16.mxu0 %v1211
    %1310 = vmatpush1.bf16.msra.mxu0 %v1210
    %1311 = vmatprep.subr.bf16.mxu0 %v1207
    %1312 = vmatpush1.bf16.msra.mxu0 %v1206
    %1313 = vmatprep.subr.bf16.mxu0 %v1203
    %1314 = vmatpush1.bf16.msra.mxu0 %v1202
    %1315 = vmatprep.subr.bf16.mxu0 %v1199
    %1316 = vmatpush1.bf16.msra.mxu0 %v1198
    %1317 = vmatprep.subr.bf16.mxu0 0
    %1318 = vmatpush2.bf16.msra.mxu0 0
    %1319 = vmatprep.subr.bf16.mxu0 0
    %1320 = vmatpush2.bf16.msra.mxu0 0
    %1321 = vmatprep.subr.bf16.mxu0 0
    %1322 = vmatpush2.bf16.msra.mxu0 0
    %1323 = vmatprep.subr.bf16.mxu0 0
    %1324 = vmatpush2.bf16.msra.mxu0 0
    %1325 = vmatprep.subr.bf16.mxu0 0
    %1326 = vmatpush2.bf16.msra.mxu0 0
    %1327 = vmatprep.subr.bf16.mxu0 0
    %1328 = vmatpush2.bf16.msra.mxu0 0
    %1329 = vmatprep.subr.bf16.mxu0 0
    %1330 = vmatpush2.bf16.msra.mxu0 0
    %1331 = vmatprep.subr.bf16.mxu0 0
    %1332 = vmatpush2.bf16.msra.mxu0 0
    %1333 = vmatprep.mubr.bf16.mxu0 0
    %1334 = vmatmul.mubr.bf16.gmra.mxu0 %v1045
    %v1335 = vpop.f32.mrf.mxu0
    %v1336 = vadd.f32 %v1091, %v1335
    %v1337 = vpop.f32.mrf.mxu0
    %v1338 = vadd.f32 %v1095, %v1337
    %v1339 = vpop.f32.mrf.mxu0
    %v1340 = vpop.f32.mrf.mxu0
    %1341 = vdwg.mxu0
    %v1342 = vmax.f32 %v1295, 0.0
    %v1343 = vmax.f32 %v1297, 0.0
    %v1344 = vmax.f32 %v1336, 0.0
    %v1345 = vmax.f32 %v1338, 0.0
    %v1346 = vpack.c.bf16 %v1342, %v1342
    %v1347 = vpack.c.bf16 %v1343, %v1343
    %v1348 = vpack.c.bf16 %v1344, %v1344
    %v1349 = vpack.c.bf16 %v1345, %v1345
    %v1350 = vld [vmem:[#allocation7] sm:$0xf]
    %v1351 = vld [vmem:[#allocation7 + $0x4] sm:$0xf]
    %v1352 = vld [vmem:[#allocation7 + $0x8] sm:$0xf]
    %v1353 = vld [vmem:[#allocation7 + $0xc] sm:$0xf]
    %v1354 = vld [vmem:[#allocation7 + $0x10] sm:$0xf]
    %v1355 = vld [vmem:[#allocation7 + $0x14] sm:$0xf]
    %v1356 = vld [vmem:[#allocation7 + $0x18] sm:$0xf]
    %v1357 = vld [vmem:[#allocation7 + $0x1c] sm:$0xf]
    %v1358 = vld [vmem:[#allocation7 + $0x20] sm:$0xf]
    %v1359 = vld [vmem:[#allocation7 + $0x24] sm:$0xf]
    %v1360 = vld [vmem:[#allocation7 + $0x28] sm:$0xf]
    %v1361 = vld [vmem:[#allocation7 + $0x2c] sm:$0xf]
    %v1362 = vld [vmem:[#allocation7 + $0x30] sm:$0xf]
    %v1363 = vld [vmem:[#allocation7 + $0x34] sm:$0xf]
    %v1364 = vld [vmem:[#allocation7 + $0x38] sm:$0xf]
    %v1365 = vld [vmem:[#allocation7 + $0x3c] sm:$0xf]
    %v1366 = vld [vmem:[#allocation7 + $0x40] sm:$0xf]
    %v1367 = vld [vmem:[#allocation7 + $0x44] sm:$0xf]
    %v1368 = vld [vmem:[#allocation7 + $0x48] sm:$0xf]
    %v1369 = vld [vmem:[#allocation7 + $0x4c] sm:$0xf]
    %v1370 = vld [vmem:[#allocation7 + $0x50] sm:$0xf]
    %v1371 = vld [vmem:[#allocation7 + $0x54] sm:$0xf]
    %v1372 = vld [vmem:[#allocation7 + $0x58] sm:$0xf]
    %v1373 = vld [vmem:[#allocation7 + $0x5c] sm:$0xf]
    %v1374 = vld [vmem:[#allocation7 + $0x60] sm:$0xf]
    %v1375 = vld [vmem:[#allocation7 + $0x64] sm:$0xf]
    %v1376 = vld [vmem:[#allocation7 + $0x68] sm:$0xf]
    %v1377 = vld [vmem:[#allocation7 + $0x6c] sm:$0xf]
    %v1378 = vld [vmem:[#allocation7 + $0x70] sm:$0xf]
    %v1379 = vld [vmem:[#allocation7 + $0x74] sm:$0xf]
    %v1380 = vld [vmem:[#allocation7 + $0x78] sm:$0xf]
    %v1381 = vld [vmem:[#allocation7 + $0x7c] sm:$0xf]
    %v1382 = vld [vmem:[#allocation7 + $0x80] sm:$0xf]
    %v1383 = vld [vmem:[#allocation7 + $0x84] sm:$0xf]
    %v1384 = vld [vmem:[#allocation7 + $0x88] sm:$0xf]
    %v1385 = vld [vmem:[#allocation7 + $0x8c] sm:$0xf]
    %v1386 = vld [vmem:[#allocation7 + $0x90] sm:$0xf]
    %v1387 = vld [vmem:[#allocation7 + $0x94] sm:$0xf]
    %v1388 = vld [vmem:[#allocation7 + $0x98] sm:$0xf]
    %v1389 = vld [vmem:[#allocation7 + $0x9c] sm:$0xf]
    %v1390 = vld [vmem:[#allocation7 + $0xa0] sm:$0xf]
    %v1391 = vld [vmem:[#allocation7 + $0xa4] sm:$0xf]
    %v1392 = vld [vmem:[#allocation7 + $0xa8] sm:$0xf]
    %v1393 = vld [vmem:[#allocation7 + $0xac] sm:$0xf]
    %v1394 = vld [vmem:[#allocation7 + $0xb0] sm:$0xf]
    %v1395 = vld [vmem:[#allocation7 + $0xb4] sm:$0xf]
    %v1396 = vld [vmem:[#allocation7 + $0xb8] sm:$0xf]
    %v1397 = vld [vmem:[#allocation7 + $0xbc] sm:$0xf]
    %v1398 = vld [vmem:[#allocation7 + $0xc0] sm:$0xf]
    %v1399 = vld [vmem:[#allocation7 + $0xc4] sm:$0xf]
    %v1400 = vld [vmem:[#allocation7 + $0xc8] sm:$0xf]
    %v1401 = vld [vmem:[#allocation7 + $0xcc] sm:$0xf]
    %v1402 = vld [vmem:[#allocation7 + $0xd0] sm:$0xf]
    %v1403 = vld [vmem:[#allocation7 + $0xd4] sm:$0xf]
    %v1404 = vld [vmem:[#allocation7 + $0xd8] sm:$0xf]
    %v1405 = vld [vmem:[#allocation7 + $0xdc] sm:$0xf]
    %v1406 = vld [vmem:[#allocation7 + $0xe0] sm:$0xf]
    %v1407 = vld [vmem:[#allocation7 + $0xe4] sm:$0xf]
    %v1408 = vld [vmem:[#allocation7 + $0xe8] sm:$0xf]
    %v1409 = vld [vmem:[#allocation7 + $0xec] sm:$0xf]
    %v1410 = vld [vmem:[#allocation7 + $0xf0] sm:$0xf]
    %v1411 = vld [vmem:[#allocation7 + $0xf4] sm:$0xf]
    %v1412 = vld [vmem:[#allocation7 + $0xf8] sm:$0xf]
    %v1413 = vld [vmem:[#allocation7 + $0xfc] sm:$0xf]
    %v1414 = vld [vmem:[%s6 + $0xb] sm:$0x1]
    %v1416 = vlaneseq
    %v1417 = vshrl.u32 %v1416, 7
    %v1418 = vsub.s32 0, %v1417
    %v1419 = vrot.slane %v1414, %v1418
    %v1485 = vunpack.c.l.b16 %v1350
    %v1486 = vunpack.c.l.b16 %v1351
    %v1487 = vunpack.c.l.b16 %v1352
    %v1488 = vunpack.c.l.b16 %v1353
    %v1489 = vunpack.c.l.b16 %v1354
    %v1490 = vunpack.c.l.b16 %v1355
    %v1491 = vunpack.c.l.b16 %v1356
    %v1492 = vunpack.c.l.b16 %v1357
    %v1493 = vunpack.c.l.b16 %v1358
    %v1494 = vunpack.c.l.b16 %v1359
    %v1495 = vunpack.c.l.b16 %v1360
    %v1496 = vunpack.c.l.b16 %v1361
    %v1497 = vunpack.c.l.b16 %v1362
    %v1498 = vunpack.c.l.b16 %v1363
    %v1499 = vunpack.c.l.b16 %v1364
    %v1500 = vunpack.c.l.b16 %v1365
    %v1501 = vunpack.c.l.b16 %v1366
    %v1502 = vunpack.c.l.b16 %v1367
    %v1503 = vunpack.c.l.b16 %v1368
    %v1504 = vunpack.c.l.b16 %v1369
    %v1505 = vunpack.c.l.b16 %v1370
    %v1506 = vunpack.c.l.b16 %v1371
    %v1507 = vunpack.c.l.b16 %v1372
    %v1508 = vunpack.c.l.b16 %v1373
    %v1509 = vunpack.c.l.b16 %v1374
    %v1510 = vunpack.c.l.b16 %v1375
    %v1511 = vunpack.c.l.b16 %v1376
    %v1512 = vunpack.c.l.b16 %v1377
    %v1513 = vunpack.c.l.b16 %v1378
    %v1514 = vunpack.c.l.b16 %v1379
    %v1515 = vunpack.c.l.b16 %v1380
    %v1516 = vunpack.c.l.b16 %v1381
    %v1517 = vunpack.c.l.b16 %v1382
    %v1518 = vunpack.c.l.b16 %v1383
    %v1519 = vunpack.c.l.b16 %v1384
    %v1520 = vunpack.c.l.b16 %v1385
    %v1521 = vunpack.c.l.b16 %v1386
    %v1522 = vunpack.c.l.b16 %v1387
    %v1523 = vunpack.c.l.b16 %v1388
    %v1524 = vunpack.c.l.b16 %v1389
    %v1525 = vunpack.c.l.b16 %v1390
    %v1526 = vunpack.c.l.b16 %v1391
    %v1527 = vunpack.c.l.b16 %v1392
    %v1528 = vunpack.c.l.b16 %v1393
    %v1529 = vunpack.c.l.b16 %v1394
    %v1530 = vunpack.c.l.b16 %v1395
    %v1531 = vunpack.c.l.b16 %v1396
    %v1532 = vunpack.c.l.b16 %v1397
    %v1533 = vunpack.c.l.b16 %v1398
    %v1534 = vunpack.c.l.b16 %v1399
    %v1535 = vunpack.c.l.b16 %v1400
    %v1536 = vunpack.c.l.b16 %v1401
    %v1537 = vunpack.c.l.b16 %v1402
    %v1538 = vunpack.c.l.b16 %v1403
    %v1539 = vunpack.c.l.b16 %v1404
    %v1540 = vunpack.c.l.b16 %v1405
    %v1541 = vunpack.c.l.b16 %v1406
    %v1542 = vunpack.c.l.b16 %v1407
    %v1543 = vunpack.c.l.b16 %v1408
    %v1544 = vunpack.c.l.b16 %v1409
    %v1545 = vunpack.c.l.b16 %v1410
    %v1546 = vunpack.c.l.b16 %v1411
    %v1547 = vunpack.c.l.b16 %v1412
    %v1548 = vunpack.c.l.b16 %v1413
    %v1549 = vpack.c.b16 %v1486, %v1485
    %v1550 = vpack.c.b16 %v1488, %v1487
    %v1551 = vpack.c.b16 %v1490, %v1489
    %v1552 = vpack.c.b16 %v1492, %v1491
    %v1553 = vpack.c.b16 %v1494, %v1493
    %v1554 = vpack.c.b16 %v1496, %v1495
    %v1555 = vpack.c.b16 %v1498, %v1497
    %v1556 = vpack.c.b16 %v1500, %v1499
    %v1557 = vpack.c.b16 %v1502, %v1501
    %v1558 = vpack.c.b16 %v1504, %v1503
    %v1559 = vpack.c.b16 %v1506, %v1505
    %v1560 = vpack.c.b16 %v1508, %v1507
    %v1561 = vpack.c.b16 %v1510, %v1509
    %v1562 = vpack.c.b16 %v1512, %v1511
    %v1563 = vpack.c.b16 %v1514, %v1513
    %v1564 = vpack.c.b16 %v1516, %v1515
    %v1565 = vpack.c.b16 %v1518, %v1517
    %v1566 = vpack.c.b16 %v1520, %v1519
    %v1567 = vpack.c.b16 %v1522, %v1521
    %v1568 = vpack.c.b16 %v1524, %v1523
    %v1569 = vpack.c.b16 %v1526, %v1525
    %v1570 = vpack.c.b16 %v1528, %v1527
    %v1571 = vpack.c.b16 %v1530, %v1529
    %v1572 = vpack.c.b16 %v1532, %v1531
    %v1573 = vpack.c.b16 %v1534, %v1533
    %v1574 = vpack.c.b16 %v1536, %v1535
    %v1575 = vpack.c.b16 %v1538, %v1537
    %v1576 = vpack.c.b16 %v1540, %v1539
    %v1577 = vpack.c.b16 %v1542, %v1541
    %v1578 = vpack.c.b16 %v1544, %v1543
    %v1579 = vpack.c.b16 %v1546, %v1545
    %v1580 = vpack.c.b16 %v1548, %v1547
    %1613 = vmatprep.subr.bf16.mxu0 0
    %1614 = vmatpush1.bf16.msra.mxu0 %v1556
    %1615 = vmatprep.subr.bf16.mxu0 0
    %1616 = vmatpush1.bf16.msra.mxu0 %v1555
    %1617 = vmatprep.subr.bf16.mxu0 0
    %1618 = vmatpush1.bf16.msra.mxu0 %v1554
    %1619 = vmatprep.subr.bf16.mxu0 0
    %1620 = vmatpush1.bf16.msra.mxu0 %v1553
    %1621 = vmatprep.subr.bf16.mxu0 0
    %1622 = vmatpush1.bf16.msra.mxu0 %v1552
    %1623 = vmatprep.subr.bf16.mxu0 0
    %1624 = vmatpush1.bf16.msra.mxu0 %v1551
    %1625 = vmatprep.subr.bf16.mxu0 0
    %1626 = vmatpush1.bf16.msra.mxu0 %v1550
    %1627 = vmatprep.subr.bf16.mxu0 0
    %1628 = vmatpush1.bf16.msra.mxu0 %v1549
    %1629 = vmatprep.subr.bf16.mxu0 0
    %1630 = vmatpush2.bf16.msra.mxu0 %v1564
    %1631 = vmatprep.subr.bf16.mxu0 0
    %1632 = vmatpush2.bf16.msra.mxu0 %v1563
    %1633 = vmatprep.subr.bf16.mxu0 0
    %1634 = vmatpush2.bf16.msra.mxu0 %v1562
    %1635 = vmatprep.subr.bf16.mxu0 0
    %1636 = vmatpush2.bf16.msra.mxu0 %v1561
    %1637 = vmatprep.subr.bf16.mxu0 0
    %1638 = vmatpush2.bf16.msra.mxu0 %v1560
    %1639 = vmatprep.subr.bf16.mxu0 0
    %1640 = vmatpush2.bf16.msra.mxu0 %v1559
    %1641 = vmatprep.subr.bf16.mxu0 0
    %1642 = vmatpush2.bf16.msra.mxu0 %v1558
    %1643 = vmatprep.subr.bf16.mxu0 0
    %1644 = vmatpush2.bf16.msra.mxu0 %v1557
    %1645 = vmatprep.mubr.bf16.mxu0 %v1347
    %1646 = vmatmul.mubr.bf16.gmra.mxu0 %v1346
    %v1647 = vpop.f32.mrf.mxu0
    %v1648 = vadd.f32 %v1419, %v1647
    %v1649 = vpop.f32.mrf.mxu0
    %v1650 = vpop.f32.mrf.mxu0
    %v1651 = vpop.f32.mrf.mxu0
    %1652 = vdwg.mxu0
    %1653 = vmatprep.subr.bf16.mxu0 0
    %1654 = vmatpush1.bf16.msra.mxu0 %v1572
    %1655 = vmatprep.subr.bf16.mxu0 0
    %1656 = vmatpush1.bf16.msra.mxu0 %v1571
    %1657 = vmatprep.subr.bf16.mxu0 0
    %1658 = vmatpush1.bf16.msra.mxu0 %v1570
    %1659 = vmatprep.subr.bf16.mxu0 0
    %1660 = vmatpush1.bf16.msra.mxu0 %v1569
    %1661 = vmatprep.subr.bf16.mxu0 0
    %1662 = vmatpush1.bf16.msra.mxu0 %v1568
    %1663 = vmatprep.subr.bf16.mxu0 0
    %1664 = vmatpush1.bf16.msra.mxu0 %v1567
    %1665 = vmatprep.subr.bf16.mxu0 0
    %1666 = vmatpush1.bf16.msra.mxu0 %v1566
    %1667 = vmatprep.subr.bf16.mxu0 0
    %1668 = vmatpush1.bf16.msra.mxu0 %v1565
    %1669 = vmatprep.subr.bf16.mxu0 0
    %1670 = vmatpush2.bf16.msra.mxu0 %v1580
    %1671 = vmatprep.subr.bf16.mxu0 0
    %1672 = vmatpush2.bf16.msra.mxu0 %v1579
    %1673 = vmatprep.subr.bf16.mxu0 0
    %1674 = vmatpush2.bf16.msra.mxu0 %v1578
    %1675 = vmatprep.subr.bf16.mxu0 0
    %1676 = vmatpush2.bf16.msra.mxu0 %v1577
    %1677 = vmatprep.subr.bf16.mxu0 0
    %1678 = vmatpush2.bf16.msra.mxu0 %v1576
    %1679 = vmatprep.subr.bf16.mxu0 0
    %1680 = vmatpush2.bf16.msra.mxu0 %v1575
    %1681 = vmatprep.subr.bf16.mxu0 0
    %1682 = vmatpush2.bf16.msra.mxu0 %v1574
    %1683 = vmatprep.subr.bf16.mxu0 0
    %1684 = vmatpush2.bf16.msra.mxu0 %v1573
    %1685 = vmatprep.mubr.bf16.mxu0 %v1349
    %1686 = vmatmul.mubr.bf16.gmra.mxu0 %v1348
    %v1687 = vpop.f32.mrf.mxu0
    %v1688 = vadd.f32 %v1648, %v1687
    %v1689 = vpop.f32.mrf.mxu0
    %v1690 = vpop.f32.mrf.mxu0
    %v1691 = vpop.f32.mrf.mxu0
    %1692 = vdwg.mxu0
    %1693 = vst [vmem:[%s7] sm:$0xff] %v1688
    // Predicated region
    $region46: #{fused_forward.1} parent=1 // pred_check
      _
    $region47: #{fused_forward.1} parent=1 // pred_check_branch
      %1695 = sbr.rel (0) target = $region49
    $region48: #{fused_forward.1} parent=1 // pred_region
      _
    $region49: #{fused_forward.1} parent=1 // pred_fallthru
      _
    // Predicated region
    $region50: #{fused_forward.1} parent=1 // pred_check
      _
    $region51: #{fused_forward.1} parent=1 // pred_check_branch
      %1697 = sbr.rel (0) target = $region53
    $region52: #{fused_forward.1} parent=1 // pred_region
      _
    $region53: #{fused_forward.1} parent=1 // pred_fallthru
      _
    %1698 = vsyncpa [#allocation3], 1
    %1699 = vsyncpa [#allocation5], 1
    %1700 = vsyncpa [#allocation8], 1

</llo_original>
